<compile_context>
chip_gen: v6e
topology: v6e:2x2x1
jax: 0.10.0
libtpu: 0.0.40
codegen_flags: <defaults>
</compile_context>

<pallas_src>
import jax
import jax.numpy as jnp
import numpy as np
from jax import lax
from jax.experimental import pallas as pl
from jax.experimental.pallas import tpu as pltpu

# ----------------------------- static configuration ----------------------------------
B = 2
HEADS = 2
HEAD_DIM = 4
DIM = HEADS * HEAD_DIM          # input_dim == output_dim
N = 16                          # window size; K == N
N8 = N // 8
NWIN = 1                        # 'n' must be 1
SCALE = HEAD_DIM ** -0.5        # == 0.5 exactly (folded into w_q)
BN_EPS = 1e-5


def _pick_batch_block():
    # grid=(B,) 'parallel' maps the two batches onto v7x's two TensorCores; on single-TC
    # parts (v5e / v6e) one grid step with the batch loop unrolled in-kernel is cheaper.
    try:
        kind = jax.devices()[0].device_kind.lower()
        if any(tag in kind for tag in ("v5e", "v5 lite", "v5lite", "v6")):
            return B
    except Exception:
        pass
    return 1


BATCH_BLOCK = _pick_batch_block()


# ----------------------------------- fused kernel ------------------------------------
def _fused_kernel(x_ref, p3_ref, wl_ref, wq_ref, wk_ref, rb_ref,
                  wq1_ref, wk1_ref, wv1t_ref, t12_ref, pp_ref,
                  out_ref, attn_ref):
    """Whole WindowAttention forward for a block of batches.

    x_ref   : (BB, N, DIM)      input window (channels-last)
    p3_ref  : (BB, 3, N, N)     relative positions, channels-first (lane-dense (N,N) planes)
    wl/wq/wk: (DIM, DIM)        linear_input / q_conv / k_conv weights (BN scale & SCALE folded)
    rb_ref  : (4, DIM)          row biases: [b_lin_f, b_q*SCALE, b_k, bn3 shift]
    wq1/wk1 : (N8, N)           query_conv / key_conv weights (BN scale folded)
    wv1t    : (DIM, DIM)        value_conv weight, pre-transposed + BN scale folded
    t12_ref : (N8, 2)           bn1 / bn2 shifts (columns)
    pp_ref  : SMEM (17,)        [linear_p folded W1 (9), b1 (3), W2 (3), b2 (1), alpha (1)]
    """
    # Hoist weight / bias loads once; they are shared across the in-block batch loop.
    wl = wl_ref[...]
    wq = wq_ref[...]
    wk = wk_ref[...]
    wq1 = wq1_ref[...]
    wk1 = wk1_ref[...]
    wv1t = wv1t_ref[...]
    b_lin = rb_ref[0:1, :]
    b_q = rb_ref[1:2, :]
    b_k = rb_ref[2:3, :]
    t3 = rb_ref[3:4, :]
    t1 = t12_ref[:, 0:1]
    t2 = t12_ref[:, 1:2]
    # linear_p scalars + alpha from SMEM (cheap scalar loads, broadcast onto vregs).
    a = [pp_ref[i] for i in range(9)]
    b1f = [pp_ref[9 + c] for c in range(3)]
    w2 = [pp_ref[12 + c] for c in range(3)]
    b2 = pp_ref[15]
    alpha = pp_ref[16]

    for i in range(x_ref.shape[0]):                      # static unroll over the batch block
        x = x_ref[i]                                     # (N, DIM)

        # ---- linear_input: Linear + BN2d (folded) + ReLU -------------------------------
        y = jnp.maximum(jnp.dot(x, wl, preferred_element_type=jnp.float32) + b_lin, 0.0)

        # ---- linear_p positional bias: pure VPU elementwise on (N, N) planes ------------
        p0 = p3_ref[i, 0]
        p1 = p3_ref[i, 1]
        p2 = p3_ref[i, 2]
        pb = None
        for c in range(3):
            hc = jnp.maximum(p0 * a[3 * c + 0] + p1 * a[3 * c + 1] + p2 * a[3 * c + 2]
                             + b1f[c], 0.0)
            term = hc * w2[c]
            pb = term if pb is None else pb + term
        pb = pb + b2                                     # (N, N)

        # ---- window attention (scale folded into wq); heads unrolled in-kernel ----------
        q = jnp.dot(y, wq, preferred_element_type=jnp.float32) + b_q      # (N, DIM)
        k = jnp.dot(y, wk, preferred_element_type=jnp.float32) + b_k      # (N, DIM)
        for h in range(HEADS):
            hs, he = h * HEAD_DIM, (h + 1) * HEAD_DIM
            # q_h . k_h^T : operands are <= 1 vreg; Mosaic handles the transposed minor dim
            # in the matmul directly — materializing k^T would add an equal-cost relayout.
            dots = lax.dot_general(q[:, hs:he], k[:, hs:he],
                                   (((1,), (1,)), ((), ())),
                                   preferred_element_type=jnp.float32) + pb      # (N, N)
            m = jnp.max(dots, axis=-1, keepdims=True)
            e = jnp.exp(dots - m)
            s = jnp.sum(e, axis=-1, keepdims=True)
            # second renorm attn/(1e-9 + sum(attn)) is an f32 no-op (rows already sum to 1).
            attn_ref[i, h] = e * pl.reciprocal(s, approx=True)

        # ---- point-attention branch, entirely in (N, C) layout --------------------------
        pq = jnp.maximum(jnp.dot(wq1, y, preferred_element_type=jnp.float32) + t1, 0.0)  # (N8, C)
        pk = jnp.maximum(jnp.dot(wk1, y, preferred_element_type=jnp.float32) + t2, 0.0)  # (N8, C)
        # similarity = proj_key^T @ proj_query  -> (C, C)
        sim = lax.dot_general(pk, pq, (((0,), (0,)), ((), ())),
                              preferred_element_type=jnp.float32)
        aff = jnp.max(sim, axis=-1, keepdims=True) - sim
        m2 = jnp.max(aff, axis=-1, keepdims=True)
        e2 = jnp.exp(aff - m2)
        aff = e2 * pl.reciprocal(jnp.sum(e2, axis=-1, keepdims=True), approx=True)       # (C, C)
        # proj_value^T directly in (N, C):  relu(y @ (s3*Wv1)^T + t3)
        pvt = jnp.maximum(jnp.dot(y, wv1t, preferred_element_type=jnp.float32) + t3, 0.0)
        # out = (alpha * aff @ pv + x_hat^T)^T = alpha * pv^T @ aff^T + y   -> (N, C) directly
        outb = alpha * lax.dot_general(pvt, aff, (((1,), (1,)), ((), ())),
                                       preferred_element_type=jnp.float32) + y
        out_ref[i] = outb


# --------------------------------- pallas_call wrapper --------------------------------
def window_attention_forward(x, p_r, KP):
    """x: (B, 1, N, DIM), p_r: (B, 1, N, N, 3) -> (out (B, N, DIM), attn (B, H, 1, N, N))."""
    x2d = x.reshape(B, NWIN * N, DIM)
    # channels-first relative positions: three lane-dense (N, N) planes per batch.
    p3 = p_r.reshape(B, N, N, 3).transpose(0, 3, 1, 2)

    grid_b = B // BATCH_BLOCK
    # NOTE: output lane widths (DIM=8 / N=16) are < 128, so stores are masked; packing the
    # ~1.25 KB of outputs into a 128-lane slab would need an in-kernel relayout of comparable
    # cost, so the natural layouts are kept.
    out, attn = pl.pallas_call(
        _fused_kernel,
        grid=(grid_b,),
        in_specs=[
            pl.BlockSpec((BATCH_BLOCK, N, DIM), lambda b: (b, 0, 0)),        # x
            pl.BlockSpec((BATCH_BLOCK, 3, N, N), lambda b: (b, 0, 0, 0)),    # p_r (channels-first)
            pl.BlockSpec((DIM, DIM), lambda b: (0, 0)),                      # w_lin (folded)
            pl.BlockSpec((DIM, DIM), lambda b: (0, 0)),                      # w_q (scale folded)
            pl.BlockSpec((DIM, DIM), lambda b: (0, 0)),                      # w_k
            pl.BlockSpec((4, DIM), lambda b: (0, 0)),                        # packed row biases
            pl.BlockSpec((N8, N), lambda b: (0, 0)),                         # wq1 (folded)
            pl.BlockSpec((N8, N), lambda b: (0, 0)),                         # wk1 (folded)
            pl.BlockSpec((DIM, DIM), lambda b: (0, 0)),                      # wv1^T (folded)
            pl.BlockSpec((N8, 2), lambda b: (0, 0)),                         # bn1/bn2 shifts
            pl.BlockSpec(memory_space=pltpu.MemorySpace.SMEM),               # scalars (17,)
        ],
        out_specs=[
            pl.BlockSpec((BATCH_BLOCK, N, DIM), lambda b: (b, 0, 0)),
            pl.BlockSpec((BATCH_BLOCK, HEADS, N, N), lambda b: (b, 0, 0, 0)),
        ],
        out_shape=[
            jax.ShapeDtypeStruct((B, N, DIM), jnp.float32),
            jax.ShapeDtypeStruct((B, HEADS, N, N), jnp.float32),
        ],
        compiler_params=pltpu.CompilerParams(dimension_semantics=("parallel",)),
    )(x2d, p3, KP['w_lin'], KP['w_q'], KP['w_k'], KP['row_b'],
      KP['wq1'], KP['wk1'], KP['wv1t'], KP['t12'], KP['pp'])

    return out, attn.reshape(B, HEADS, NWIN, N, N)


# ------------------------------ deterministic parameters ------------------------------
def _bn_affine(c):
    gamma = jnp.ones((c,), jnp.float32)
    beta = jnp.zeros((c,), jnp.float32)
    mean = jnp.zeros((c,), jnp.float32)
    var = jnp.ones((c,), jnp.float32)
    scale = gamma / jnp.sqrt(var + BN_EPS)
    shift = beta - mean * scale
    return scale, shift


def init_params():
    """Raw module-like parameters (weights stored (in, out); 1-D biases)."""
    keys = iter(jax.random.split(jax.random.PRNGKey(42), 16))

    def nrm(shape, s=0.2):
        return (s * jax.random.normal(next(keys), shape)).astype(jnp.float32)

    P = {}
    # linear_input: Linear(DIM, DIM) + BN2d(DIM) + ReLU
    P['w_lin'] = nrm((DIM, DIM)); P['b_lin'] = nrm((DIM,))
    P['s_lin'], P['t_lin'] = _bn_affine(DIM)
    # 1x1 Conv2d q / k (v_conv, trans_conv, after_norm, linear_out are dead in forward)
    P['w_q'] = nrm((DIM, DIM)); P['b_q'] = nrm((DIM,))
    P['w_k'] = nrm((DIM, DIM)); P['b_k'] = nrm((DIM,))
    # linear_p: Linear(3,3) + BN3d(3) + ReLU + Linear(3,1)
    P['wp1'] = nrm((3, 3)); P['bp1'] = nrm((3,))
    P['sp'], P['tp'] = _bn_affine(3)
    P['wp2'] = nrm((3, 1)); P['bp2'] = nrm((1,))
    # query/key Conv1d(N, N//8, bias=False)+BN1d; value Conv1d(DIM, DIM, bias=False)+BN1d
    P['wq1'] = nrm((N8, N)); P['wk1'] = nrm((N8, N)); P['wv1'] = nrm((DIM, DIM))
    P['s1'], P['t1'] = _bn_affine(N8)
    P['s2'], P['t2'] = _bn_affine(N8)
    P['s3'], P['t3'] = _bn_affine(DIM)
    # nn.Parameter(torch.zeros(1)); 0.5 so the point-attention path is exercised.
    P['alpha'] = jnp.full((1,), 0.5, jnp.float32)
    return P


def fold_params(P):
    """One-time folding of BN affines / SCALE into the weights; pack small params."""
    K = {}
    K['w_lin'] = P['w_lin'] * P['s_lin']                                    # BN2d scale folded
    K['w_q'] = P['w_q'] * jnp.float32(SCALE)                                # attention scale folded
    K['w_k'] = P['w_k']
    K['row_b'] = jnp.stack([P['b_lin'] * P['s_lin'] + P['t_lin'],
                            P['b_q'] * jnp.float32(SCALE),
                            P['b_k'],
                            P['t3']], axis=0)                               # (4, DIM)
    K['wq1'] = P['s1'][:, None] * P['wq1']                                  # bn1 scale folded
    K['wk1'] = P['s2'][:, None] * P['wk1']                                  # bn2 scale folded
    K['wv1t'] = (P['s3'][:, None] * P['wv1']).T                             # bn3 scale folded + pre-T
    K['t12'] = jnp.stack([P['t1'], P['t2']], axis=1)                        # (N8, 2)
    # linear_p folded:  h[c] = relu(sum_k p[k]*A[c,k] + b1f[c]);  bias = sum_c h[c]*w2[c] + b2
    A = P['wp1'].T * P['sp'][:, None]                                       # (3, 3)
    b1f = P['bp1'] * P['sp'] + P['tp']
    K['pp'] = jnp.concatenate([A.reshape(-1), b1f, P['wp2'][:, 0],
                               P['bp2'], P['alpha']]).astype(jnp.float32)   # (17,) -> SMEM
    return K


# ------------------------------ plain-JAX reference (check) ---------------------------
def reference_forward(x, p_r, P):
    xx = jnp.maximum((x @ P['w_lin'] + P['b_lin']) * P['s_lin'] + P['t_lin'], 0.0)
    x_q = xx @ P['w_q'] + P['b_q']
    x_k = xx @ P['w_k'] + P['b_k']

    def split(t):  # 'b n k (h d) -> b h n k d'
        return t.reshape(B, NWIN, N, HEADS, HEAD_DIM).transpose(0, 3, 1, 2, 4)

    dots = jnp.einsum('bhnid,bhnjd->bhnij', split(x_q), split(x_k)) * SCALE
    pr = jnp.maximum((p_r @ P['wp1'] + P['bp1']) * P['sp'] + P['tp'], 0.0)
    pr = (pr @ P['wp2'] + P['bp2']).reshape(B, NWIN, N, N, 1).transpose(0, 4, 1, 2, 3)
    dots = dots + pr
    attn = jax.nn.softmax(dots, axis=-1)
    attn = attn / (1e-9 + attn.sum(axis=-1, keepdims=True))

    x_hat = xx.reshape(B, N, DIM)
    shortcut = x_hat.transpose(0, 2, 1)
    pq = jnp.maximum(jnp.einsum('oi,bic->boc', P['wq1'], x_hat)
                     * P['s1'][:, None] + P['t1'][:, None], 0.0)
    pk = jnp.maximum(jnp.einsum('oi,bic->boc', P['wk1'], x_hat)
                     * P['s2'][:, None] + P['t2'][:, None], 0.0)
    sim = jnp.matmul(pk.transpose(0, 2, 1), pq)
    aff = jax.nn.softmax(jnp.max(sim, axis=-1, keepdims=True) - sim, axis=-1)
    pv = jnp.maximum(jnp.einsum('oi,bin->bon', P['wv1'], shortcut)
                     * P['s3'][:, None] + P['t3'][:, None], 0.0)
    out = P['alpha'][0] * jnp.matmul(aff, pv) + shortcut
    return out.transpose(0, 2, 1), attn


# ----------------------------------------- main ---------------------------------------
if __name__ == "__main__":
    kx, kp = jax.random.split(jax.random.PRNGKey(0))
    x = jax.random.normal(kx, (B, NWIN, N, DIM), jnp.float32)
    p_r = jax.random.normal(kp, (B, NWIN, N, N, 3), jnp.float32)
    P = init_params()
    KP = fold_params(P)          # one-time, outside the jitted forward

    fwd = jax.jit(window_attention_forward)
    out, attn = fwd(x, p_r, KP)
    jax.block_until_ready((out, attn))

    ref_out, ref_attn = reference_forward(x, p_r, P)
    assert out.shape == (B, N, DIM) and attn.shape == (B, HEADS, NWIN, N, N)
    np.testing.assert_allclose(np.asarray(out), np.asarray(ref_out), atol=1e-2, rtol=1e-2)
    np.testing.assert_allclose(np.asarray(attn), np.asarray(ref_attn), atol=1e-2, rtol=1e-2)
    print("KERNEL_OK")
</pallas_src>

<mosaic_0001>
module attributes {stable_mosaic.version = 11 : i64} {
  func.func @_fused_kernel(%arg0: i32, %arg1: memref<1x16x8xf32, #tpu.memory_space<vmem>>, %arg2: memref<1x3x16x16xf32, #tpu.memory_space<vmem>>, %arg3: memref<8x8xf32, #tpu.memory_space<vmem>>, %arg4: memref<8x8xf32, #tpu.memory_space<vmem>>, %arg5: memref<8x8xf32, #tpu.memory_space<vmem>>, %arg6: memref<4x8xf32, #tpu.memory_space<vmem>>, %arg7: memref<2x16xf32, #tpu.memory_space<vmem>>, %arg8: memref<2x16xf32, #tpu.memory_space<vmem>>, %arg9: memref<8x8xf32, #tpu.memory_space<vmem>>, %arg10: memref<2x2xf32, #tpu.memory_space<vmem>>, %arg11: memref<17xf32, #tpu.memory_space<smem>>, %arg12: memref<1x16x8xf32, #tpu.memory_space<vmem>>, %arg13: memref<1x2x16x16xf32, #tpu.memory_space<vmem>>) attributes {dimension_semantics = [#tpu.dimension_semantics<parallel>], iteration_bounds = array<i64: 2>, scalar_prefetch = 0 : i64, scratch_operands = 0 : i64, tpu.core_type = #tpu.core_type<tc>, window_params = [{transform_indices = @transform_0, window_bounds = array<i64: 1, 16, 8>}, {transform_indices = @transform_1, window_bounds = array<i64: 1, 3, 16, 16>}, {pipeline_mode = #tpu.pipeline_mode<synchronous>, transform_indices = @transform_2, window_bounds = array<i64: 8, 8>}, {pipeline_mode = #tpu.pipeline_mode<synchronous>, transform_indices = @transform_3, window_bounds = array<i64: 8, 8>}, {pipeline_mode = #tpu.pipeline_mode<synchronous>, transform_indices = @transform_4, window_bounds = array<i64: 8, 8>}, {pipeline_mode = #tpu.pipeline_mode<synchronous>, transform_indices = @transform_5, window_bounds = array<i64: 4, 8>}, {pipeline_mode = #tpu.pipeline_mode<synchronous>, transform_indices = @transform_6, window_bounds = array<i64: 2, 16>}, {pipeline_mode = #tpu.pipeline_mode<synchronous>, transform_indices = @transform_7, window_bounds = array<i64: 2, 16>}, {pipeline_mode = #tpu.pipeline_mode<synchronous>, transform_indices = @transform_8, window_bounds = array<i64: 8, 8>}, {pipeline_mode = #tpu.pipeline_mode<synchronous>, transform_indices = @transform_9, window_bounds = array<i64: 2, 2>}, {transform_indices = @transform_10, window_bounds = array<i64: 17>}, {transform_indices = @transform_11, window_bounds = array<i64: 1, 16, 8>}, {transform_indices = @transform_12, window_bounds = array<i64: 1, 2, 16, 16>}]} {
    %c0 = arith.constant 0 : index
    %c0_0 = arith.constant 0 : index
    %0 = vector.load %arg3[%c0, %c0_0] : memref<8x8xf32, #tpu.memory_space<vmem>>, vector<8x8xf32>
    %c0_1 = arith.constant 0 : index
    %c0_2 = arith.constant 0 : index
    %1 = vector.load %arg4[%c0_1, %c0_2] : memref<8x8xf32, #tpu.memory_space<vmem>>, vector<8x8xf32>
    %c0_3 = arith.constant 0 : index
    %c0_4 = arith.constant 0 : index
    %2 = vector.load %arg5[%c0_3, %c0_4] : memref<8x8xf32, #tpu.memory_space<vmem>>, vector<8x8xf32>
    %c0_5 = arith.constant 0 : index
    %c0_6 = arith.constant 0 : index
    %3 = vector.load %arg7[%c0_5, %c0_6] : memref<2x16xf32, #tpu.memory_space<vmem>>, vector<2x16xf32>
    %c0_7 = arith.constant 0 : index
    %c0_8 = arith.constant 0 : index
    %4 = vector.load %arg8[%c0_7, %c0_8] : memref<2x16xf32, #tpu.memory_space<vmem>>, vector<2x16xf32>
    %c0_9 = arith.constant 0 : index
    %c0_10 = arith.constant 0 : index
    %5 = vector.load %arg9[%c0_9, %c0_10] : memref<8x8xf32, #tpu.memory_space<vmem>>, vector<8x8xf32>
    %c0_11 = arith.constant 0 : index
    %c0_12 = arith.constant 0 : index
    %6 = vector.load %arg6[%c0_11, %c0_12] : memref<4x8xf32, #tpu.memory_space<vmem>>, vector<1x8xf32>
    %c1 = arith.constant 1 : index
    %c0_13 = arith.constant 0 : index
    %7 = vector.load %arg6[%c1, %c0_13] : memref<4x8xf32, #tpu.memory_space<vmem>>, vector<1x8xf32>
    %c2 = arith.constant 2 : index
    %c0_14 = arith.constant 0 : index
    %8 = vector.load %arg6[%c2, %c0_14] : memref<4x8xf32, #tpu.memory_space<vmem>>, vector<1x8xf32>
    %c3 = arith.constant 3 : index
    %c0_15 = arith.constant 0 : index
    %9 = vector.load %arg6[%c3, %c0_15] : memref<4x8xf32, #tpu.memory_space<vmem>>, vector<1x8xf32>
    %c0_16 = arith.constant 0 : index
    %c0_17 = arith.constant 0 : index
    %10 = vector.load %arg10[%c0_16, %c0_17] : memref<2x2xf32, #tpu.memory_space<vmem>>, vector<2x1xf32>
    %c0_18 = arith.constant 0 : index
    %c1_19 = arith.constant 1 : index
    %11 = vector.load %arg10[%c0_18, %c1_19] : memref<2x2xf32, #tpu.memory_space<vmem>>, vector<2x1xf32>
    %c0_20 = arith.constant 0 : index
    %12 = memref.load %arg11[%c0_20] : memref<17xf32, #tpu.memory_space<smem>>
    %c1_21 = arith.constant 1 : index
    %13 = memref.load %arg11[%c1_21] : memref<17xf32, #tpu.memory_space<smem>>
    %c2_22 = arith.constant 2 : index
    %14 = memref.load %arg11[%c2_22] : memref<17xf32, #tpu.memory_space<smem>>
    %c3_23 = arith.constant 3 : index
    %15 = memref.load %arg11[%c3_23] : memref<17xf32, #tpu.memory_space<smem>>
    %c4 = arith.constant 4 : index
    %16 = memref.load %arg11[%c4] : memref<17xf32, #tpu.memory_space<smem>>
    %c5 = arith.constant 5 : index
    %17 = memref.load %arg11[%c5] : memref<17xf32, #tpu.memory_space<smem>>
    %c6 = arith.constant 6 : index
    %18 = memref.load %arg11[%c6] : memref<17xf32, #tpu.memory_space<smem>>
    %c7 = arith.constant 7 : index
    %19 = memref.load %arg11[%c7] : memref<17xf32, #tpu.memory_space<smem>>
    %c8 = arith.constant 8 : index
    %20 = memref.load %arg11[%c8] : memref<17xf32, #tpu.memory_space<smem>>
    %c9 = arith.constant 9 : index
    %21 = memref.load %arg11[%c9] : memref<17xf32, #tpu.memory_space<smem>>
    %c10 = arith.constant 10 : index
    %22 = memref.load %arg11[%c10] : memref<17xf32, #tpu.memory_space<smem>>
    %c11 = arith.constant 11 : index
    %23 = memref.load %arg11[%c11] : memref<17xf32, #tpu.memory_space<smem>>
    %c12 = arith.constant 12 : index
    %24 = memref.load %arg11[%c12] : memref<17xf32, #tpu.memory_space<smem>>
    %c13 = arith.constant 13 : index
    %25 = memref.load %arg11[%c13] : memref<17xf32, #tpu.memory_space<smem>>
    %c14 = arith.constant 14 : index
    %26 = memref.load %arg11[%c14] : memref<17xf32, #tpu.memory_space<smem>>
    %c15 = arith.constant 15 : index
    %27 = memref.load %arg11[%c15] : memref<17xf32, #tpu.memory_space<smem>>
    %c16 = arith.constant 16 : index
    %28 = memref.load %arg11[%c16] : memref<17xf32, #tpu.memory_space<smem>>
    %c0_24 = arith.constant 0 : index
    %c0_25 = arith.constant 0 : index
    %c0_26 = arith.constant 0 : index
    %29 = vector.load %arg1[%c0_24, %c0_25, %c0_26] : memref<1x16x8xf32, #tpu.memory_space<vmem>>, vector<1x16x8xf32>
    %30 = vector.shape_cast %29 : vector<1x16x8xf32> to vector<16x8xf32>
    %cst = arith.constant dense<0.000000e+00> : vector<16x8xf32>
    %31 = tpu.matmul %30, %0, %cst {dimension_numbers = #tpu.dot_dimension_numbers<[1], [0], [0], [1], [0, 0, 1, 1], [], []>} : vector<16x8xf32>, vector<8x8xf32>, vector<16x8xf32> -> vector<16x8xf32>
    %32 = vector.broadcast %6 : vector<1x8xf32> to vector<16x8xf32>
    %33 = arith.addf %31, %32 : vector<16x8xf32>
    %cst_27 = arith.constant 0.000000e+00 : f32
    %34 = vector.broadcast %cst_27 : f32 to vector<16x8xf32>
    %35 = arith.maximumf %33, %34 : vector<16x8xf32>
    %c0_28 = arith.constant 0 : index
    %c0_29 = arith.constant 0 : index
    %c0_30 = arith.constant 0 : index
    %c0_31 = arith.constant 0 : index
    %36 = vector.load %arg2[%c0_28, %c0_29, %c0_30, %c0_31] : memref<1x3x16x16xf32, #tpu.memory_space<vmem>>, vector<1x1x16x16xf32>
    %37 = vector.shape_cast %36 : vector<1x1x16x16xf32> to vector<16x16xf32>
    %c0_32 = arith.constant 0 : index
    %c1_33 = arith.constant 1 : index
    %c0_34 = arith.constant 0 : index
    %c0_35 = arith.constant 0 : index
    %38 = vector.load %arg2[%c0_32, %c1_33, %c0_34, %c0_35] : memref<1x3x16x16xf32, #tpu.memory_space<vmem>>, vector<1x1x16x16xf32>
    %39 = vector.shape_cast %38 : vector<1x1x16x16xf32> to vector<16x16xf32>
    %c0_36 = arith.constant 0 : index
    %c2_37 = arith.constant 2 : index
    %c0_38 = arith.constant 0 : index
    %c0_39 = arith.constant 0 : index
    %40 = vector.load %arg2[%c0_36, %c2_37, %c0_38, %c0_39] : memref<1x3x16x16xf32, #tpu.memory_space<vmem>>, vector<1x1x16x16xf32>
    %41 = vector.shape_cast %40 : vector<1x1x16x16xf32> to vector<16x16xf32>
    %42 = vector.broadcast %12 : f32 to vector<16x16xf32>
    %43 = arith.mulf %37, %42 : vector<16x16xf32>
    %44 = vector.broadcast %13 : f32 to vector<16x16xf32>
    %45 = arith.mulf %39, %44 : vector<16x16xf32>
    %46 = arith.addf %43, %45 : vector<16x16xf32>
    %47 = vector.broadcast %14 : f32 to vector<16x16xf32>
    %48 = arith.mulf %41, %47 : vector<16x16xf32>
    %49 = arith.addf %46, %48 : vector<16x16xf32>
    %50 = vector.broadcast %21 : f32 to vector<16x16xf32>
    %51 = arith.addf %49, %50 : vector<16x16xf32>
    %cst_40 = arith.constant 0.000000e+00 : f32
    %52 = vector.broadcast %cst_40 : f32 to vector<16x16xf32>
    %53 = arith.maximumf %51, %52 : vector<16x16xf32>
    %54 = vector.broadcast %24 : f32 to vector<16x16xf32>
    %55 = arith.mulf %53, %54 : vector<16x16xf32>
    %56 = vector.broadcast %15 : f32 to vector<16x16xf32>
    %57 = arith.mulf %37, %56 : vector<16x16xf32>
    %58 = vector.broadcast %16 : f32 to vector<16x16xf32>
    %59 = arith.mulf %39, %58 : vector<16x16xf32>
    %60 = arith.addf %57, %59 : vector<16x16xf32>
    %61 = vector.broadcast %17 : f32 to vector<16x16xf32>
    %62 = arith.mulf %41, %61 : vector<16x16xf32>
    %63 = arith.addf %60, %62 : vector<16x16xf32>
    %64 = vector.broadcast %22 : f32 to vector<16x16xf32>
    %65 = arith.addf %63, %64 : vector<16x16xf32>
    %cst_41 = arith.constant 0.000000e+00 : f32
    %66 = vector.broadcast %cst_41 : f32 to vector<16x16xf32>
    %67 = arith.maximumf %65, %66 : vector<16x16xf32>
    %68 = vector.broadcast %25 : f32 to vector<16x16xf32>
    %69 = arith.mulf %67, %68 : vector<16x16xf32>
    %70 = arith.addf %55, %69 : vector<16x16xf32>
    %71 = vector.broadcast %18 : f32 to vector<16x16xf32>
    %72 = arith.mulf %37, %71 : vector<16x16xf32>
    %73 = vector.broadcast %19 : f32 to vector<16x16xf32>
    %74 = arith.mulf %39, %73 : vector<16x16xf32>
    %75 = arith.addf %72, %74 : vector<16x16xf32>
    %76 = vector.broadcast %20 : f32 to vector<16x16xf32>
    %77 = arith.mulf %41, %76 : vector<16x16xf32>
    %78 = arith.addf %75, %77 : vector<16x16xf32>
    %79 = vector.broadcast %23 : f32 to vector<16x16xf32>
    %80 = arith.addf %78, %79 : vector<16x16xf32>
    %cst_42 = arith.constant 0.000000e+00 : f32
    %81 = vector.broadcast %cst_42 : f32 to vector<16x16xf32>
    %82 = arith.maximumf %80, %81 : vector<16x16xf32>
    %83 = vector.broadcast %26 : f32 to vector<16x16xf32>
    %84 = arith.mulf %82, %83 : vector<16x16xf32>
    %85 = arith.addf %70, %84 : vector<16x16xf32>
    %86 = vector.broadcast %27 : f32 to vector<16x16xf32>
    %87 = arith.addf %85, %86 : vector<16x16xf32>
    %cst_43 = arith.constant dense<0.000000e+00> : vector<16x8xf32>
    %88 = tpu.matmul %35, %1, %cst_43 {dimension_numbers = #tpu.dot_dimension_numbers<[1], [0], [0], [1], [0, 0, 1, 1], [], []>} : vector<16x8xf32>, vector<8x8xf32>, vector<16x8xf32> -> vector<16x8xf32>
    %89 = vector.broadcast %7 : vector<1x8xf32> to vector<16x8xf32>
    %90 = arith.addf %88, %89 : vector<16x8xf32>
    %cst_44 = arith.constant dense<0.000000e+00> : vector<16x8xf32>
    %91 = tpu.matmul %35, %2, %cst_44 {dimension_numbers = #tpu.dot_dimension_numbers<[1], [0], [0], [1], [0, 0, 1, 1], [], []>} : vector<16x8xf32>, vector<8x8xf32>, vector<16x8xf32> -> vector<16x8xf32>
    %92 = vector.broadcast %8 : vector<1x8xf32> to vector<16x8xf32>
    %93 = arith.addf %91, %92 : vector<16x8xf32>
    %94 = vector.extract_strided_slice %90 {offsets = [0, 0], sizes = [16, 4], strides = [1, 1]} : vector<16x8xf32> to vector<16x4xf32>
    %95 = vector.extract_strided_slice %93 {offsets = [0, 0], sizes = [16, 4], strides = [1, 1]} : vector<16x8xf32> to vector<16x4xf32>
    %cst_45 = arith.constant dense<0.000000e+00> : vector<16x16xf32>
    %96 = tpu.matmul %94, %95, %cst_45 {dimension_numbers = #tpu.dot_dimension_numbers<[1], [1], [0], [0], [0, 0, 1, 0], [], []>} : vector<16x4xf32>, vector<16x4xf32>, vector<16x16xf32> -> vector<16x16xf32>
    %97 = arith.addf %96, %87 : vector<16x16xf32>
    %cst_46 = arith.constant dense<0xFF800000> : vector<16xf32>
    %98 = vector.multi_reduction <maximumf>, %97, %cst_46 [1] : vector<16x16xf32> to vector<16xf32>
    %99 = vector.shape_cast %98 : vector<16xf32> to vector<16x1xf32>
    %100 = vector.broadcast %99 : vector<16x1xf32> to vector<16x16xf32>
    %101 = arith.subf %97, %100 : vector<16x16xf32>
    %102 = math.exp %101 : vector<16x16xf32>
    %cst_47 = arith.constant dense<0.000000e+00> : vector<16xf32>
    %103 = vector.multi_reduction <add>, %102, %cst_47 [1] : vector<16x16xf32> to vector<16xf32>
    %104 = vector.shape_cast %103 : vector<16xf32> to vector<16x1xf32>
    %105 = tpu.reciprocal %104 {approx = true} : vector<16x1xf32> -> vector<16x1xf32>
    %106 = vector.broadcast %105 : vector<16x1xf32> to vector<16x16xf32>
    %107 = arith.mulf %102, %106 : vector<16x16xf32>
    %c0_48 = arith.constant 0 : index
    %c0_49 = arith.constant 0 : index
    %c0_50 = arith.constant 0 : index
    %c0_51 = arith.constant 0 : index
    %108 = vector.load %arg13[%c0_48, %c0_49, %c0_50, %c0_51] : memref<1x2x16x16xf32, #tpu.memory_space<vmem>>, vector<1x1x16x16xf32>
    %109 = vector.shape_cast %108 : vector<1x1x16x16xf32> to vector<16x16xf32>
    %110 = vector.shape_cast %107 : vector<16x16xf32> to vector<1x1x16x16xf32>
    tpu.vector_store %arg13[%c0_48, %c0_49, %c0_50, %c0_51], %110 {strides = array<i32>} : memref<1x2x16x16xf32, #tpu.memory_space<vmem>>, vector<1x1x16x16xf32>,
    %111 = vector.extract_strided_slice %90 {offsets = [0, 4], sizes = [16, 4], strides = [1, 1]} : vector<16x8xf32> to vector<16x4xf32>
    %112 = vector.extract_strided_slice %93 {offsets = [0, 4], sizes = [16, 4], strides = [1, 1]} : vector<16x8xf32> to vector<16x4xf32>
    %cst_52 = arith.constant dense<0.000000e+00> : vector<16x16xf32>
    %113 = tpu.matmul %111, %112, %cst_52 {dimension_numbers = #tpu.dot_dimension_numbers<[1], [1], [0], [0], [0, 0, 1, 0], [], []>} : vector<16x4xf32>, vector<16x4xf32>, vector<16x16xf32> -> vector<16x16xf32>
    %114 = arith.addf %113, %87 : vector<16x16xf32>
    %cst_53 = arith.constant dense<0xFF800000> : vector<16xf32>
    %115 = vector.multi_reduction <maximumf>, %114, %cst_53 [1] : vector<16x16xf32> to vector<16xf32>
    %116 = vector.shape_cast %115 : vector<16xf32> to vector<16x1xf32>
    %117 = vector.broadcast %116 : vector<16x1xf32> to vector<16x16xf32>
    %118 = arith.subf %114, %117 : vector<16x16xf32>
    %119 = math.exp %118 : vector<16x16xf32>
    %cst_54 = arith.constant dense<0.000000e+00> : vector<16xf32>
    %120 = vector.multi_reduction <add>, %119, %cst_54 [1] : vector<16x16xf32> to vector<16xf32>
    %121 = vector.shape_cast %120 : vector<16xf32> to vector<16x1xf32>
    %122 = tpu.reciprocal %121 {approx = true} : vector<16x1xf32> -> vector<16x1xf32>
    %123 = vector.broadcast %122 : vector<16x1xf32> to vector<16x16xf32>
    %124 = arith.mulf %119, %123 : vector<16x16xf32>
    %c0_55 = arith.constant 0 : index
    %c1_56 = arith.constant 1 : index
    %c0_57 = arith.constant 0 : index
    %c0_58 = arith.constant 0 : index
    %125 = vector.load %arg13[%c0_55, %c1_56, %c0_57, %c0_58] : memref<1x2x16x16xf32, #tpu.memory_space<vmem>>, vector<1x1x16x16xf32>
    %126 = vector.shape_cast %125 : vector<1x1x16x16xf32> to vector<16x16xf32>
    %127 = vector.shape_cast %124 : vector<16x16xf32> to vector<1x1x16x16xf32>
    tpu.vector_store %arg13[%c0_55, %c1_56, %c0_57, %c0_58], %127 {strides = array<i32>} : memref<1x2x16x16xf32, #tpu.memory_space<vmem>>, vector<1x1x16x16xf32>,
    %cst_59 = arith.constant dense<0.000000e+00> : vector<2x8xf32>
    %128 = tpu.matmul %3, %35, %cst_59 {dimension_numbers = #tpu.dot_dimension_numbers<[1], [0], [0], [1], [0, 0, 1, 1], [], []>} : vector<2x16xf32>, vector<16x8xf32>, vector<2x8xf32> -> vector<2x8xf32>
    %129 = vector.broadcast %10 : vector<2x1xf32> to vector<2x8xf32>
    %130 = arith.addf %128, %129 : vector<2x8xf32>
    %cst_60 = arith.constant 0.000000e+00 : f32
    %131 = vector.broadcast %cst_60 : f32 to vector<2x8xf32>
    %132 = arith.maximumf %130, %131 : vector<2x8xf32>
    %cst_61 = arith.constant dense<0.000000e+00> : vector<2x8xf32>
    %133 = tpu.matmul %4, %35, %cst_61 {dimension_numbers = #tpu.dot_dimension_numbers<[1], [0], [0], [1], [0, 0, 1, 1], [], []>} : vector<2x16xf32>, vector<16x8xf32>, vector<2x8xf32> -> vector<2x8xf32>
    %134 = vector.broadcast %11 : vector<2x1xf32> to vector<2x8xf32>
    %135 = arith.addf %133, %134 : vector<2x8xf32>
    %cst_62 = arith.constant 0.000000e+00 : f32
    %136 = vector.broadcast %cst_62 : f32 to vector<2x8xf32>
    %137 = arith.maximumf %135, %136 : vector<2x8xf32>
    %cst_63 = arith.constant dense<0.000000e+00> : vector<8x8xf32>
    %138 = tpu.matmul %137, %132, %cst_63 {dimension_numbers = #tpu.dot_dimension_numbers<[0], [0], [1], [1], [0, 1, 1, 1], [], []>} : vector<2x8xf32>, vector<2x8xf32>, vector<8x8xf32> -> vector<8x8xf32>
    %cst_64 = arith.constant dense<0xFF800000> : vector<8xf32>
    %139 = vector.multi_reduction <maximumf>, %138, %cst_64 [1] : vector<8x8xf32> to vector<8xf32>
    %140 = vector.shape_cast %139 : vector<8xf32> to vector<8x1xf32>
    %141 = vector.broadcast %140 : vector<8x1xf32> to vector<8x8xf32>
    %142 = arith.subf %141, %138 : vector<8x8xf32>
    %cst_65 = arith.constant dense<0xFF800000> : vector<8xf32>
    %143 = vector.multi_reduction <maximumf>, %142, %cst_65 [1] : vector<8x8xf32> to vector<8xf32>
    %144 = vector.shape_cast %143 : vector<8xf32> to vector<8x1xf32>
    %145 = vector.broadcast %144 : vector<8x1xf32> to vector<8x8xf32>
    %146 = arith.subf %142, %145 : vector<8x8xf32>
    %147 = math.exp %146 : vector<8x8xf32>
    %cst_66 = arith.constant dense<0.000000e+00> : vector<8xf32>
    %148 = vector.multi_reduction <add>, %147, %cst_66 [1] : vector<8x8xf32> to vector<8xf32>
    %149 = vector.shape_cast %148 : vector<8xf32> to vector<8x1xf32>
    %150 = tpu.reciprocal %149 {approx = true} : vector<8x1xf32> -> vector<8x1xf32>
    %151 = vector.broadcast %150 : vector<8x1xf32> to vector<8x8xf32>
    %152 = arith.mulf %147, %151 : vector<8x8xf32>
    %cst_67 = arith.constant dense<0.000000e+00> : vector<16x8xf32>
    %153 = tpu.matmul %35, %5, %cst_67 {dimension_numbers = #tpu.dot_dimension_numbers<[1], [0], [0], [1], [0, 0, 1, 1], [], []>} : vector<16x8xf32>, vector<8x8xf32>, vector<16x8xf32> -> vector<16x8xf32>
    %154 = vector.broadcast %9 : vector<1x8xf32> to vector<16x8xf32>
    %155 = arith.addf %153, %154 : vector<16x8xf32>
    %cst_68 = arith.constant 0.000000e+00 : f32
    %156 = vector.broadcast %cst_68 : f32 to vector<16x8xf32>
    %157 = arith.maximumf %155, %156 : vector<16x8xf32>
    %cst_69 = arith.constant dense<0.000000e+00> : vector<16x8xf32>
    %158 = tpu.matmul %157, %152, %cst_69 {dimension_numbers = #tpu.dot_dimension_numbers<[1], [1], [0], [0], [0, 0, 1, 0], [], []>} : vector<16x8xf32>, vector<8x8xf32>, vector<16x8xf32> -> vector<16x8xf32>
    %159 = vector.broadcast %28 : f32 to vector<16x8xf32>
    %160 = arith.mulf %159, %158 : vector<16x8xf32>
    %161 = arith.addf %160, %35 : vector<16x8xf32>
    %c0_70 = arith.constant 0 : index
    %c0_71 = arith.constant 0 : index
    %c0_72 = arith.constant 0 : index
    %162 = vector.load %arg12[%c0_70, %c0_71, %c0_72] : memref<1x16x8xf32, #tpu.memory_space<vmem>>, vector<1x16x8xf32>
    %163 = vector.shape_cast %162 : vector<1x16x8xf32> to vector<16x8xf32>
    %164 = vector.shape_cast %161 : vector<16x8xf32> to vector<1x16x8xf32>
    tpu.vector_store %arg12[%c0_70, %c0_71, %c0_72], %164 {strides = array<i32>} : memref<1x16x8xf32, #tpu.memory_space<vmem>>, vector<1x16x8xf32>,
    return
  }
  func.func @transform_0(%arg0: i32) -> (i32, i32, i32) {
    %c0_i32 = arith.constant 0 : i32
    %c0_i32_0 = arith.constant 0 : i32
    %c0_i32_1 = arith.constant 0 : i32
    return %arg0, %c0_i32, %c0_i32_0 : i32, i32, i32
  }
  func.func @transform_1(%arg0: i32) -> (i32, i32, i32, i32) {
    %c0_i32 = arith.constant 0 : i32
    %c0_i32_0 = arith.constant 0 : i32
    %c0_i32_1 = arith.constant 0 : i32
    %c0_i32_2 = arith.constant 0 : i32
    return %arg0, %c0_i32, %c0_i32_0, %c0_i32_1 : i32, i32, i32, i32
  }
  func.func @transform_2(%arg0: i32) -> (i32, i32) {
    %c0_i32 = arith.constant 0 : i32
    %c0_i32_0 = arith.constant 0 : i32
    %c0_i32_1 = arith.constant 0 : i32
    return %c0_i32, %c0_i32_0 : i32, i32
  }
  func.func @transform_3(%arg0: i32) -> (i32, i32) {
    %c0_i32 = arith.constant 0 : i32
    %c0_i32_0 = arith.constant 0 : i32
    %c0_i32_1 = arith.constant 0 : i32
    return %c0_i32, %c0_i32_0 : i32, i32
  }
  func.func @transform_4(%arg0: i32) -> (i32, i32) {
    %c0_i32 = arith.constant 0 : i32
    %c0_i32_0 = arith.constant 0 : i32
    %c0_i32_1 = arith.constant 0 : i32
    return %c0_i32, %c0_i32_0 : i32, i32
  }
  func.func @transform_5(%arg0: i32) -> (i32, i32) {
    %c0_i32 = arith.constant 0 : i32
    %c0_i32_0 = arith.constant 0 : i32
    %c0_i32_1 = arith.constant 0 : i32
    return %c0_i32, %c0_i32_0 : i32, i32
  }
  func.func @transform_6(%arg0: i32) -> (i32, i32) {
    %c0_i32 = arith.constant 0 : i32
    %c0_i32_0 = arith.constant 0 : i32
    %c0_i32_1 = arith.constant 0 : i32
    return %c0_i32, %c0_i32_0 : i32, i32
  }
  func.func @transform_7(%arg0: i32) -> (i32, i32) {
    %c0_i32 = arith.constant 0 : i32
    %c0_i32_0 = arith.constant 0 : i32
    %c0_i32_1 = arith.constant 0 : i32
    return %c0_i32, %c0_i32_0 : i32, i32
  }
  func.func @transform_8(%arg0: i32) -> (i32, i32) {
    %c0_i32 = arith.constant 0 : i32
    %c0_i32_0 = arith.constant 0 : i32
    %c0_i32_1 = arith.constant 0 : i32
    return %c0_i32, %c0_i32_0 : i32, i32
  }
  func.func @transform_9(%arg0: i32) -> (i32, i32) {
    %c0_i32 = arith.constant 0 : i32
    %c0_i32_0 = arith.constant 0 : i32
    %c0_i32_1 = arith.constant 0 : i32
    return %c0_i32, %c0_i32_0 : i32, i32
  }
  func.func @transform_10(%arg0: i32) -> i32 {
    %c0_i32 = arith.constant 0 : i32
    %c0_i32_0 = arith.constant 0 : i32
    return %c0_i32 : i32
  }
  func.func @transform_11(%arg0: i32) -> (i32, i32, i32) {
    %c0_i32 = arith.constant 0 : i32
    %c0_i32_0 = arith.constant 0 : i32
    %c0_i32_1 = arith.constant 0 : i32
    return %arg0, %c0_i32, %c0_i32_0 : i32, i32, i32
  }
  func.func @transform_12(%arg0: i32) -> (i32, i32, i32, i32) {
    %c0_i32 = arith.constant 0 : i32
    %c0_i32_0 = arith.constant 0 : i32
    %c0_i32_1 = arith.constant 0 : i32
    %c0_i32_2 = arith.constant 0 : i32
    return %arg0, %c0_i32, %c0_i32_0, %c0_i32_1 : i32, i32, i32, i32
  }
}

</mosaic_0001>

<llo_original>
// kernel: window_attention_forward.1
$region0: #{window_attention_forward.1}
  #allocation0 [shape = 'u32[]', space=smem, size = 0x4, offset = 0x4, fixed_abs, tag = 'smem constant byte address 0x4 - core index']
  #allocation1 [shape = 'u32[144,128]{1,0:T(1,128)}', space=vmem, size = 0x12000, scoped, tag = 'internal scratch']
  %s0 = inlined_call_operand.vmem [shape: f32[2,16,8], index: 0, kind: input, shape index: {}]
  %s1 = inlined_call_operand.hbm [shape: f32[2,3,16,16], index: 1, kind: input, shape index: {}]
  %s2 = inlined_call_operand.vmem [shape: f32[8,8], index: 2, kind: input, shape index: {}]
  %s3 = inlined_call_operand.vmem [shape: f32[8,8], index: 3, kind: input, shape index: {}]
  %s4 = inlined_call_operand.vmem [shape: f32[8,8], index: 4, kind: input, shape index: {}]
  %s5 = inlined_call_operand.vmem [shape: f32[4,8], index: 5, kind: input, shape index: {}]
  %s6 = inlined_call_operand.vmem [shape: f32[2,16], index: 6, kind: input, shape index: {}]
  %s7 = inlined_call_operand.vmem [shape: f32[2,16], index: 7, kind: input, shape index: {}]
  %s8 = inlined_call_operand.vmem [shape: f32[8,8], index: 8, kind: input, shape index: {}]
  %s9 = inlined_call_operand.vmem [shape: f32[2,2], index: 9, kind: input, shape index: {}]
  %s10 = inlined_call_operand.vmem [shape: f32[17], index: 10, kind: input, shape index: {}]
  %s11 = inlined_call_operand.vmem [shape: f32[2,16,8], index: 11, kind: output, shape index: {0}]
  %s12 = inlined_call_operand.hbm [shape: f32[2,2,16,16], index: 12, kind: output, shape index: {1}]
  %13 = xla_tuple %s11, %s12
  %s14 = sld [smem:[#allocation0]]
  $region93: #{window_attention_forward.1} parent=0
    _
  %s16 = ssub.s32 1, %s14
  %s17 = scalar_select 0, %s16, %s14
  $region1: #{window_attention_forward.1} parent=0
    #allocation2 [shape = 'u8[49152]{0}', space=vmem, size = 0xc000, scoped, tag = 'input window, operand 1']
    #allocation3 [shape = 's32[2]{0}', space=sflag, size = 0x8, scoped, tag = 'scoped memory for window_attention_forward.1']
    #allocation4 [shape = 's32[2]{0}', space=sflag, size = 0x8, scoped, tag = 'scoped memory for window_attention_forward.1']
    #allocation5 [shape = 's32[2]{0}', space=sflag, size = 0x8, scoped, tag = 'scoped memory for window_attention_forward.1']
    #allocation6 [shape = 'u8[512]{0}', space=smem, size = 0x200, scoped, tag = 'input window, operand 10, single buffered']
    #allocation7 [shape = 'u8[32768]{0}', space=vmem, size = 0x8000, scoped, tag = 'output window, operand 1']
    %18 = vsyncpa [#allocation3], 0
    %s19 = scalar_lea.sflag [#allocation3], 1
    %20 = vsyncpa %s19, 0
    %21 = vsyncpa [#allocation5], 0
    %22 = vsyncpa [#allocation4], 0
    %s23 = scalar_lea.sflag [#allocation4], 1
    %24 = vsyncpa %s23, 0
    loop: start=0, step=1, limit=4
    $region2: #{window_attention_forward.1} parent=1 // loop_pre_header
      _
    $region3: #{window_attention_forward.1} parent=1 // loop_header
      %s26 = sphi 0, %s30
      %p27 = scmp.ge.s32.totalorder %s26, 4
      %s36 = sphi 0, %s38
      %s39 = sphi 0, %s36
      %s40 = sphi 0, %s39
      %s56 = sphi 0, %s40
      %s62 = sphi 0, %s64
      %s65 = sphi 0, %s62
      %s66 = sphi 0, %s65
      %s82 = sphi 0, %s66
      %s86 = sphi 0, %s86
      %s88 = sphi 0, %s86
      %s89 = sphi 0, %s88
      %s103 = sphi 0, %s89
      %s107 = sphi 0, %s107
      %s109 = sphi 0, %s107
      %s110 = sphi 0, %s109
      %s124 = sphi 0, %s110
      %s128 = sphi 0, %s128
      %s130 = sphi 0, %s128
      %s131 = sphi 0, %s130
      %s145 = sphi 0, %s131
      %s149 = sphi 0, %s149
      %s151 = sphi 0, %s149
      %s152 = sphi 0, %s151
      %s166 = sphi 0, %s152
      %s170 = sphi 0, %s170
      %s172 = sphi 0, %s170
      %s173 = sphi 0, %s172
      %s187 = sphi 0, %s173
      %s191 = sphi 0, %s191
      %s193 = sphi 0, %s191
      %s194 = sphi 0, %s193
      %s208 = sphi 0, %s194
      %s212 = sphi 0, %s212
      %s214 = sphi 0, %s212
      %s215 = sphi 0, %s214
      %s229 = sphi 0, %s215
      %s233 = sphi 0, %s233
      %s235 = sphi 0, %s233
      %s236 = sphi 0, %s235
      %s250 = sphi 0, %s236
      %s254 = sphi 0, %s254
      %s256 = sphi 0, %s254
      %s257 = sphi 0, %s256
      %s271 = sphi 0, %s257
      %s277 = sphi 0, %s279
      %s280 = sphi 0, %s277
      %s281 = sphi 0, %s280
      %s297 = sphi 0, %s281
      %s303 = sphi 0, %s305
      %s306 = sphi 0, %s303
      %s307 = sphi 0, %s306
      %s323 = sphi 0, %s307
    $region4: #{window_attention_forward.1} parent=1 // loop_header_branch
      %29 = sbr.rel (%p27) target = $region8
    $region5: #{window_attention_forward.1} parent=1 // loop_body
      %s31 = ssub.s32 %s26, 1
      %s32 = ssub.s32 %s26, 2
      %s33 = sadd.s32 %s26, 1
      %s34 = ssub.s32 %s26, %s33
      %p35 = scmp.eq.s32.totalorder %s34, 0
      %s37 = sadd.s32 %s36, 1
      %s38 = scalar_select %p35, %s36, %s37
      %p41 = pneg %p35
      %p42 = scmp.eq.s32.totalorder %s26, 1
      %p43 = por %p41, %p42
      %p44 = scmp.ne.s32.totalorder %s36, %s39
      %p45 = scmp.eq.s32.totalorder %s26, 0
      %p46 = por %p44, %p45
      %p47 = scmp.ne.s32.totalorder %s36, %s39
      %p48 = scmp.eq.s32.totalorder %s31, 1
      %p49 = por %p47, %p48
      %p50 = scmp.ne.s32.totalorder %s39, %s40
      %p51 = scmp.eq.s32.totalorder %s31, 0
      %p52 = por %p50, %p51
      %p53 = scmp.ne.s32.totalorder %s39, %s40
      %p54 = scmp.eq.s32.totalorder %s32, 1
      %p55 = por %p53, %p54
      %p57 = scmp.ne.s32.totalorder %s40, %s56
      %p58 = scmp.eq.s32.totalorder %s32, 0
      %p59 = por %p57, %p58
      %s60 = ssub.s32 %s26, %s33
      %p61 = scmp.eq.s32.totalorder %s60, 0
      %s63 = sadd.s32 %s62, 1
      %s64 = scalar_select %p61, %s62, %s63
      %p67 = pneg %p61
      %p68 = scmp.eq.s32.totalorder %s26, 1
      %p69 = por %p67, %p68
      %p70 = scmp.ne.s32.totalorder %s62, %s65
      %p71 = scmp.eq.s32.totalorder %s26, 0
      %p72 = por %p70, %p71
      %p73 = scmp.ne.s32.totalorder %s62, %s65
      %p74 = scmp.eq.s32.totalorder %s31, 1
      %p75 = por %p73, %p74
      %p76 = scmp.ne.s32.totalorder %s65, %s66
      %p77 = scmp.eq.s32.totalorder %s31, 0
      %p78 = por %p76, %p77
      %p79 = scmp.ne.s32.totalorder %s65, %s66
      %p80 = scmp.eq.s32.totalorder %s32, 1
      %p81 = por %p79, %p80
      %p83 = scmp.ne.s32.totalorder %s66, %s82
      %p84 = scmp.eq.s32.totalorder %s32, 0
      %p85 = por %p83, %p84
      %s87 = sadd.s32 %s86, 1
      %p90 = scmp.eq.s32.totalorder %s26, 1
      %p91 = scmp.ne.s32.totalorder %s86, %s88
      %p92 = scmp.eq.s32.totalorder %s26, 0
      %p93 = por %p91, %p92
      %p94 = scmp.ne.s32.totalorder %s86, %s88
      %p95 = scmp.eq.s32.totalorder %s31, 1
      %p96 = por %p94, %p95
      %p97 = scmp.ne.s32.totalorder %s88, %s89
      %p98 = scmp.eq.s32.totalorder %s31, 0
      %p99 = por %p97, %p98
      %p100 = scmp.ne.s32.totalorder %s88, %s89
      %p101 = scmp.eq.s32.totalorder %s32, 1
      %p102 = por %p100, %p101
      %p104 = scmp.ne.s32.totalorder %s89, %s103
      %p105 = scmp.eq.s32.totalorder %s32, 0
      %p106 = por %p104, %p105
      %s108 = sadd.s32 %s107, 1
      %p111 = scmp.eq.s32.totalorder %s26, 1
      %p112 = scmp.ne.s32.totalorder %s107, %s109
      %p113 = scmp.eq.s32.totalorder %s26, 0
      %p114 = por %p112, %p113
      %p115 = scmp.ne.s32.totalorder %s107, %s109
      %p116 = scmp.eq.s32.totalorder %s31, 1
      %p117 = por %p115, %p116
      %p118 = scmp.ne.s32.totalorder %s109, %s110
      %p119 = scmp.eq.s32.totalorder %s31, 0
      %p120 = por %p118, %p119
      %p121 = scmp.ne.s32.totalorder %s109, %s110
      %p122 = scmp.eq.s32.totalorder %s32, 1
      %p123 = por %p121, %p122
      %p125 = scmp.ne.s32.totalorder %s110, %s124
      %p126 = scmp.eq.s32.totalorder %s32, 0
      %p127 = por %p125, %p126
      %s129 = sadd.s32 %s128, 1
      %p132 = scmp.eq.s32.totalorder %s26, 1
      %p133 = scmp.ne.s32.totalorder %s128, %s130
      %p134 = scmp.eq.s32.totalorder %s26, 0
      %p135 = por %p133, %p134
      %p136 = scmp.ne.s32.totalorder %s128, %s130
      %p137 = scmp.eq.s32.totalorder %s31, 1
      %p138 = por %p136, %p137
      %p139 = scmp.ne.s32.totalorder %s130, %s131
      %p140 = scmp.eq.s32.totalorder %s31, 0
      %p141 = por %p139, %p140
      %p142 = scmp.ne.s32.totalorder %s130, %s131
      %p143 = scmp.eq.s32.totalorder %s32, 1
      %p144 = por %p142, %p143
      %p146 = scmp.ne.s32.totalorder %s131, %s145
      %p147 = scmp.eq.s32.totalorder %s32, 0
      %p148 = por %p146, %p147
      %s150 = sadd.s32 %s149, 1
      %p153 = scmp.eq.s32.totalorder %s26, 1
      %p154 = scmp.ne.s32.totalorder %s149, %s151
      %p155 = scmp.eq.s32.totalorder %s26, 0
      %p156 = por %p154, %p155
      %p157 = scmp.ne.s32.totalorder %s149, %s151
      %p158 = scmp.eq.s32.totalorder %s31, 1
      %p159 = por %p157, %p158
      %p160 = scmp.ne.s32.totalorder %s151, %s152
      %p161 = scmp.eq.s32.totalorder %s31, 0
      %p162 = por %p160, %p161
      %p163 = scmp.ne.s32.totalorder %s151, %s152
      %p164 = scmp.eq.s32.totalorder %s32, 1
      %p165 = por %p163, %p164
      %p167 = scmp.ne.s32.totalorder %s152, %s166
      %p168 = scmp.eq.s32.totalorder %s32, 0
      %p169 = por %p167, %p168
      %s171 = sadd.s32 %s170, 1
      %p174 = scmp.eq.s32.totalorder %s26, 1
      %p175 = scmp.ne.s32.totalorder %s170, %s172
      %p176 = scmp.eq.s32.totalorder %s26, 0
      %p177 = por %p175, %p176
      %p178 = scmp.ne.s32.totalorder %s170, %s172
      %p179 = scmp.eq.s32.totalorder %s31, 1
      %p180 = por %p178, %p179
      %p181 = scmp.ne.s32.totalorder %s172, %s173
      %p182 = scmp.eq.s32.totalorder %s31, 0
      %p183 = por %p181, %p182
      %p184 = scmp.ne.s32.totalorder %s172, %s173
      %p185 = scmp.eq.s32.totalorder %s32, 1
      %p186 = por %p184, %p185
      %p188 = scmp.ne.s32.totalorder %s173, %s187
      %p189 = scmp.eq.s32.totalorder %s32, 0
      %p190 = por %p188, %p189
      %s192 = sadd.s32 %s191, 1
      %p195 = scmp.eq.s32.totalorder %s26, 1
      %p196 = scmp.ne.s32.totalorder %s191, %s193
      %p197 = scmp.eq.s32.totalorder %s26, 0
      %p198 = por %p196, %p197
      %p199 = scmp.ne.s32.totalorder %s191, %s193
      %p200 = scmp.eq.s32.totalorder %s31, 1
      %p201 = por %p199, %p200
      %p202 = scmp.ne.s32.totalorder %s193, %s194
      %p203 = scmp.eq.s32.totalorder %s31, 0
      %p204 = por %p202, %p203
      %p205 = scmp.ne.s32.totalorder %s193, %s194
      %p206 = scmp.eq.s32.totalorder %s32, 1
      %p207 = por %p205, %p206
      %p209 = scmp.ne.s32.totalorder %s194, %s208
      %p210 = scmp.eq.s32.totalorder %s32, 0
      %p211 = por %p209, %p210
      %s213 = sadd.s32 %s212, 1
      %p216 = scmp.eq.s32.totalorder %s26, 1
      %p217 = scmp.ne.s32.totalorder %s212, %s214
      %p218 = scmp.eq.s32.totalorder %s26, 0
      %p219 = por %p217, %p218
      %p220 = scmp.ne.s32.totalorder %s212, %s214
      %p221 = scmp.eq.s32.totalorder %s31, 1
      %p222 = por %p220, %p221
      %p223 = scmp.ne.s32.totalorder %s214, %s215
      %p224 = scmp.eq.s32.totalorder %s31, 0
      %p225 = por %p223, %p224
      %p226 = scmp.ne.s32.totalorder %s214, %s215
      %p227 = scmp.eq.s32.totalorder %s32, 1
      %p228 = por %p226, %p227
      %p230 = scmp.ne.s32.totalorder %s215, %s229
      %p231 = scmp.eq.s32.totalorder %s32, 0
      %p232 = por %p230, %p231
      %s234 = sadd.s32 %s233, 1
      %p237 = scmp.eq.s32.totalorder %s26, 1
      %p238 = scmp.ne.s32.totalorder %s233, %s235
      %p239 = scmp.eq.s32.totalorder %s26, 0
      %p240 = por %p238, %p239
      %p241 = scmp.ne.s32.totalorder %s233, %s235
      %p242 = scmp.eq.s32.totalorder %s31, 1
      %p243 = por %p241, %p242
      %p244 = scmp.ne.s32.totalorder %s235, %s236
      %p245 = scmp.eq.s32.totalorder %s31, 0
      %p246 = por %p244, %p245
      %p247 = scmp.ne.s32.totalorder %s235, %s236
      %p248 = scmp.eq.s32.totalorder %s32, 1
      %p249 = por %p247, %p248
      %p251 = scmp.ne.s32.totalorder %s236, %s250
      %p252 = scmp.eq.s32.totalorder %s32, 0
      %p253 = por %p251, %p252
      %s255 = sadd.s32 %s254, 1
      %p258 = scmp.eq.s32.totalorder %s26, 1
      %p259 = scmp.ne.s32.totalorder %s254, %s256
      %p260 = scmp.eq.s32.totalorder %s26, 0
      %p261 = por %p259, %p260
      %p262 = scmp.ne.s32.totalorder %s254, %s256
      %p263 = scmp.eq.s32.totalorder %s31, 1
      %p264 = por %p262, %p263
      %p265 = scmp.ne.s32.totalorder %s256, %s257
      %p266 = scmp.eq.s32.totalorder %s31, 0
      %p267 = por %p265, %p266
      %p268 = scmp.ne.s32.totalorder %s256, %s257
      %p269 = scmp.eq.s32.totalorder %s32, 1
      %p270 = por %p268, %p269
      %p272 = scmp.ne.s32.totalorder %s257, %s271
      %p273 = scmp.eq.s32.totalorder %s32, 0
      %p274 = por %p272, %p273
      %s275 = ssub.s32 %s26, %s33
      %p276 = scmp.eq.s32.totalorder %s275, 0
      %s278 = sadd.s32 %s277, 1
      %s279 = scalar_select %p276, %s277, %s278
      %p282 = pneg %p276
      %p283 = scmp.eq.s32.totalorder %s26, 1
      %p284 = por %p282, %p283
      %p285 = scmp.ne.s32.totalorder %s277, %s280
      %p286 = scmp.eq.s32.totalorder %s26, 0
      %p287 = por %p285, %p286
      %p288 = scmp.ne.s32.totalorder %s277, %s280
      %p289 = scmp.eq.s32.totalorder %s31, 1
      %p290 = por %p288, %p289
      %p291 = scmp.ne.s32.totalorder %s280, %s281
      %p292 = scmp.eq.s32.totalorder %s31, 0
      %p293 = por %p291, %p292
      %p294 = scmp.ne.s32.totalorder %s280, %s281
      %p295 = scmp.eq.s32.totalorder %s32, 1
      %p296 = por %p294, %p295
      %p298 = scmp.ne.s32.totalorder %s281, %s297
      %p299 = scmp.eq.s32.totalorder %s32, 0
      %p300 = por %p298, %p299
      %s301 = ssub.s32 %s26, %s33
      %p302 = scmp.eq.s32.totalorder %s301, 0
      %s304 = sadd.s32 %s303, 1
      %s305 = scalar_select %p302, %s303, %s304
      %p308 = pneg %p302
      %p309 = scmp.eq.s32.totalorder %s26, 1
      %p310 = por %p308, %p309
      %p311 = scmp.ne.s32.totalorder %s303, %s306
      %p312 = scmp.eq.s32.totalorder %s26, 0
      %p313 = por %p311, %p312
      %p314 = scmp.ne.s32.totalorder %s303, %s306
      %p315 = scmp.eq.s32.totalorder %s31, 1
      %p316 = por %p314, %p315
      %p317 = scmp.ne.s32.totalorder %s306, %s307
      %p318 = scmp.eq.s32.totalorder %s31, 0
      %p319 = por %p317, %p318
      %p320 = scmp.ne.s32.totalorder %s306, %s307
      %p321 = scmp.eq.s32.totalorder %s32, 1
      %p322 = por %p320, %p321
      %p324 = scmp.ne.s32.totalorder %s307, %s323
      %p325 = scmp.eq.s32.totalorder %s32, 0
      %p326 = por %p324, %p325
      %p327 = scmp.le.s32.totalorder 1, %s26
      %p328 = scmp.lt.s32.totalorder %s26, 3
      %p329 = pnand %p327, %p328
      %p330 = pneg %p329
      // Predicated region
      $region9: #{window_attention_forward.1} parent=5 // pred_check
        _
      $region10: #{window_attention_forward.1} parent=5 // pred_check_branch
        %332 = sbr.rel (%p329) target = $region12
      $region11: #{window_attention_forward.1} parent=5 // pred_region
        %s333 = ssub.s32 %s26, 1
        // Predicated region
        $region13: #{window_attention_forward.1} parent=11 // pred_check
          %p334 = pneg %p99
        $region14: #{window_attention_forward.1} parent=11 // pred_check_branch
          %336 = sbr.rel (%p334) target = $region16
        $region15: #{window_attention_forward.1} parent=11 // pred_region
          _
        $region16: #{window_attention_forward.1} parent=11 // pred_fallthru
          _
        // Predicated region
        $region17: #{window_attention_forward.1} parent=11 // pred_check
          %p337 = pneg %p120
        $region18: #{window_attention_forward.1} parent=11 // pred_check_branch
          %339 = sbr.rel (%p337) target = $region20
        $region19: #{window_attention_forward.1} parent=11 // pred_region
          _
        $region20: #{window_attention_forward.1} parent=11 // pred_fallthru
          _
        // Predicated region
        $region21: #{window_attention_forward.1} parent=11 // pred_check
          %p340 = pneg %p141
        $region22: #{window_attention_forward.1} parent=11 // pred_check_branch
          %342 = sbr.rel (%p340) target = $region24
        $region23: #{window_attention_forward.1} parent=11 // pred_region
          _
        $region24: #{window_attention_forward.1} parent=11 // pred_fallthru
          _
        // Predicated region
        $region25: #{window_attention_forward.1} parent=11 // pred_check
          %p343 = pneg %p162
        $region26: #{window_attention_forward.1} parent=11 // pred_check_branch
          %345 = sbr.rel (%p343) target = $region28
        $region27: #{window_attention_forward.1} parent=11 // pred_region
          _
        $region28: #{window_attention_forward.1} parent=11 // pred_fallthru
          _
        // Predicated region
        $region29: #{window_attention_forward.1} parent=11 // pred_check
          %p346 = pneg %p183
        $region30: #{window_attention_forward.1} parent=11 // pred_check_branch
          %348 = sbr.rel (%p346) target = $region32
        $region31: #{window_attention_forward.1} parent=11 // pred_region
          _
        $region32: #{window_attention_forward.1} parent=11 // pred_fallthru
          _
        // Predicated region
        $region33: #{window_attention_forward.1} parent=11 // pred_check
          %p349 = pneg %p204
        $region34: #{window_attention_forward.1} parent=11 // pred_check_branch
          %351 = sbr.rel (%p349) target = $region36
        $region35: #{window_attention_forward.1} parent=11 // pred_region
          _
        $region36: #{window_attention_forward.1} parent=11 // pred_fallthru
          _
        // Predicated region
        $region37: #{window_attention_forward.1} parent=11 // pred_check
          %p352 = pneg %p225
        $region38: #{window_attention_forward.1} parent=11 // pred_check_branch
          %354 = sbr.rel (%p352) target = $region40
        $region39: #{window_attention_forward.1} parent=11 // pred_region
          _
        $region40: #{window_attention_forward.1} parent=11 // pred_fallthru
          _
        // Predicated region
        $region41: #{window_attention_forward.1} parent=11 // pred_check
          %p355 = pneg %p246
        $region42: #{window_attention_forward.1} parent=11 // pred_check_branch
          %357 = sbr.rel (%p355) target = $region44
        $region43: #{window_attention_forward.1} parent=11 // pred_region
          _
        $region44: #{window_attention_forward.1} parent=11 // pred_fallthru
          _
        // Predicated region
        $region45: #{window_attention_forward.1} parent=11 // pred_check
          %p358 = pneg %p267
        $region46: #{window_attention_forward.1} parent=11 // pred_check_branch
          %360 = sbr.rel (%p358) target = $region48
        $region47: #{window_attention_forward.1} parent=11 // pred_region
          %s362 = ssub.s32 16, 16
          %363 = vsyncadd [#allocation5], %s362
          %s365 = sshll.u32 %s10, 4
          %s366 = int_to_ptr.vmem [resolvable:$true] %s365
          %368 = dma.vmem_to_smem %s366, 16, [#allocation6], [#allocation5]
        $region48: #{window_attention_forward.1} parent=11 // pred_fallthru
          _
      $region12: #{window_attention_forward.1} parent=5 // pred_fallthru
        _
      %p369 = scmp.lt.s32.totalorder %s26, 2
      // Predicated region
      $region49: #{window_attention_forward.1} parent=5 // pred_check
        %p370 = pneg %p369
      $region50: #{window_attention_forward.1} parent=5 // pred_check_branch
        %372 = sbr.rel (%p370) target = $region52
      $region51: #{window_attention_forward.1} parent=5 // pred_region
        // Predicated region
        $region53: #{window_attention_forward.1} parent=51 // pred_check
          %p373 = pneg %p46
        $region54: #{window_attention_forward.1} parent=51 // pred_check_branch
          %375 = sbr.rel (%p373) target = $region56
        $region55: #{window_attention_forward.1} parent=51 // pred_region
          %p376 = scmp.lt.s32.totalorder %s26, 1
          %s377 = scalar_select %p376, %s26, 1
          %s378 = smul.addr %s377, 2
          %s379 = smul.addr %s378, 8
          %s380 = scalar_lea.vmem %s0, %s379
        $region56: #{window_attention_forward.1} parent=51 // pred_fallthru
          _
        // Predicated region
        $region57: #{window_attention_forward.1} parent=51 // pred_check
          %p381 = pneg %p72
        $region58: #{window_attention_forward.1} parent=51 // pred_check_branch
          %383 = sbr.rel (%p381) target = $region60
        $region59: #{window_attention_forward.1} parent=51 // pred_region
          %s384 = sand.u32 %s62, 1
          %s385 = scalar_lea.sflag [#allocation3], %s384
          %s386 = sand.u32 %s62, 1
          %s387 = smul.addr %s386, 48
          %s388 = scalar_lea.vmem [#allocation2], %s387
          %s390 = ssub.s32 768, 768
          %391 = vsyncadd %s385, %s390
          %s392 = smul.addr %s26, 6
          %s393 = smul.addr %s392, 128
          %s394 = scalar_lea.hbm %s1, %s393
          %s395 = sshll.u32 %s388, 4
          %s396 = int_to_ptr.vmem [resolvable:$true] %s395
          %401 = dma.hbm_to_vmem [thread:$0]  %s394, 768, %s396, %s385, 128, 128, 8
        $region60: #{window_attention_forward.1} parent=51 // pred_fallthru
          _
      $region52: #{window_attention_forward.1} parent=5 // pred_fallthru
        _
      %p402 = scmp.le.s32.totalorder 1, %s26
      %p403 = scmp.lt.s32.totalorder %s26, 3
      %p404 = pnand %p402, %p403
      %p405 = pneg %p404
      // Predicated region
      $region61: #{window_attention_forward.1} parent=5 // pred_check
        _
      $region62: #{window_attention_forward.1} parent=5 // pred_check_branch
        %407 = sbr.rel (%p404) target = $region64
      $region63: #{window_attention_forward.1} parent=5 // pred_region
        %s408 = ssub.s32 %s26, 1
        %s409 = sand.u32 %s65, 1
        %s410 = scalar_lea.sflag [#allocation3], %s409
        %s411 = sand.u32 %s65, 1
        %s412 = smul.addr %s411, 48
        %s413 = scalar_lea.vmem [#allocation2], %s412
        // Predicated region
        $region65: #{window_attention_forward.1} parent=63 // pred_check
          %p414 = pneg %p78
        $region66: #{window_attention_forward.1} parent=63 // pred_check_branch
          %416 = sbr.rel (%p414) target = $region68
        $region67: #{window_attention_forward.1} parent=63 // pred_region
          %417 = dma.done %s410, 768
        $region68: #{window_attention_forward.1} parent=63 // pred_fallthru
          _
        // Predicated region
        $region69: #{window_attention_forward.1} parent=63 // pred_check
          %p418 = pneg %p267
        $region70: #{window_attention_forward.1} parent=63 // pred_check_branch
          %420 = sbr.rel (%p418) target = $region72
        $region71: #{window_attention_forward.1} parent=63 // pred_region
          %421 = dma.done [#allocation5], 16
        $region72: #{window_attention_forward.1} parent=63 // pred_fallthru
          _
        %422 = sfence
        %p423 = scmp.lt.s32.totalorder %s31, 1
        %s424 = scalar_select %p423, %s31, 1
        %s425 = smul.addr %s424, 2
        %s426 = smul.addr %s425, 8
        %s427 = scalar_lea.vmem %s0, %s426
        %p428 = pneg %p52
        %p429 = pneg %p49
        %s430 = sand.u32 %s65, 1
        %s431 = scalar_lea.sflag [#allocation3], %s430
        %s432 = sand.u32 %s65, 1
        %s433 = smul.addr %s432, 48
        %s434 = scalar_lea.vmem [#allocation2], %s433
        %p435 = pneg %p78
        %p436 = pneg %p75
        %p437 = pneg %p99
        %p438 = pneg %p96
        %p439 = pneg %p120
        %p440 = pneg %p117
        %p441 = pneg %p141
        %p442 = pneg %p138
        %p443 = pneg %p162
        %p444 = pneg %p159
        %p445 = pneg %p183
        %p446 = pneg %p180
        %p447 = pneg %p204
        %p448 = pneg %p201
        %p449 = pneg %p225
        %p450 = pneg %p222
        %p451 = pneg %p246
        %p452 = pneg %p243
        %p453 = pneg %p267
        %p454 = pneg %p264
        %p455 = pneg %p293
        %p456 = pneg %p290
        %p457 = scmp.lt.s32.totalorder %s31, 1
        %s458 = scalar_select %p457, %s31, 1
        %s459 = smul.addr %s458, 2
        %s460 = smul.addr %s459, 8
        %s461 = scalar_lea.vmem %s11, %s460
        %p462 = pneg %p319
        %p463 = pneg %p316
        %s464 = sand.u32 %s306, 1
        %s465 = scalar_lea.sflag [#allocation4], %s464
        %s466 = sand.u32 %s306, 1
        %s467 = smul.addr %s466, 32
        %s468 = scalar_lea.vmem [#allocation7], %s467
        %p469 = scmp.lt.s32.totalorder %s31, 1
        %s470 = scalar_select %p469, %s31, 1
        %s471 = smul.addr %s470, 2
        %s472 = smul.addr %s471, 8
        %s473 = scalar_lea.vmem %s0, %s472
        %p474 = scmp.lt.s32.totalorder %s31, 1
        %s475 = scalar_select %p474, %s31, 1
        %s476 = smul.addr %s475, 2
        %s477 = smul.addr %s476, 8
        %s478 = scalar_lea.vmem %s11, %s477
        %v479 = vld [vmem:[%s2] sm:$0xff]
        %v480 = vld [vmem:[%s3] sm:$0xff]
        %v481 = vld [vmem:[%s4] sm:$0xff]
        %v482 = vld [vmem:[%s6] sm:$0x3]
        %v483 = vld [vmem:[%s7] sm:$0x3]
        %v484 = vld [vmem:[%s8] sm:$0xff]
        %v485 = vld [vmem:[%s5] sm:$0x1]
        %v486 = vld [vmem:[%s5 + $0x1] sm:$0x1]
        %v487 = vld [vmem:[%s5 + $0x2] sm:$0x1]
        %v488 = vld [vmem:[%s5 + $0x3] sm:$0x1]
        %v489 = vld [vmem:[%s9] sm:$0x3]
        %s490 = sld [smem:[#allocation6]]
        %s491 = sld [smem:[#allocation6 + $0x1]]
        %s492 = sld [smem:[#allocation6 + $0x2]]
        %s493 = sld [smem:[#allocation6 + $0x3]]
        %s494 = sld [smem:[#allocation6 + $0x4]]
        %s495 = sld [smem:[#allocation6 + $0x5]]
        %s496 = sld [smem:[#allocation6 + $0x6]]
        %s497 = sld [smem:[#allocation6 + $0x7]]
        %s498 = sld [smem:[#allocation6 + $0x8]]
        %s499 = sld [smem:[#allocation6 + $0x9]]
        %s500 = sld [smem:[#allocation6 + $0xa]]
        %s501 = sld [smem:[#allocation6 + $0xb]]
        %s502 = sld [smem:[#allocation6 + $0xc]]
        %s503 = sld [smem:[#allocation6 + $0xd]]
        %s504 = sld [smem:[#allocation6 + $0xe]]
        %s505 = sld [smem:[#allocation6 + $0xf]]
        %s506 = sld [smem:[#allocation6 + $0x10]]
        %v507 = vld [vmem:[%s473] sm:$0xff]
        %v508 = vld [vmem:[%s473 + $0x8] sm:$0xff]
        %v509 = vlaneseq
        %v510 = vshrl.u32 %v509, 7
        %v511 = vsub.s32 0, %v510
        %v512 = vrot.slane %v485, %v511
        %vm513 = vcmask 64512
        %v515 = vsel %vm513, %v507, 0
        %v518 = vsel %vm513, %v508, 0
        %520 = vmatprep.subr.mxu0 0.0
        %521 = vmatpush1.msra.mxu0 0.0
        %522 = vmatprep.subr.mxu0 0.0
        %523 = vmatpush1.msra.mxu0 0.0
        %524 = vmatprep.subr.mxu0 0.0
        %525 = vmatpush1.msra.mxu0 0.0
        %526 = vmatprep.subr.mxu0 0.0
        %527 = vmatpush1.msra.mxu0 0.0
        %528 = vmatprep.subr.mxu0 0.0
        %529 = vmatpush1.msra.mxu0 0.0
        %530 = vmatprep.subr.mxu0 0.0
        %531 = vmatpush1.msra.mxu0 0.0
        %532 = vmatprep.subr.mxu0 0.0
        %533 = vmatpush1.msra.mxu0 0.0
        %534 = vmatprep.subr.mxu0 0.0
        %535 = vmatpush1.msra.mxu0 0.0
        %536 = vmatprep.subr.mxu0 0.0
        %537 = vmatpush1.msra.mxu0 0.0
        %538 = vmatprep.subr.mxu0 0.0
        %539 = vmatpush1.msra.mxu0 0.0
        %540 = vmatprep.subr.mxu0 0.0
        %541 = vmatpush1.msra.mxu0 0.0
        %542 = vmatprep.subr.mxu0 0.0
        %543 = vmatpush1.msra.mxu0 0.0
        %544 = vmatprep.subr.mxu0 0.0
        %545 = vmatpush1.msra.mxu0 0.0
        %546 = vmatprep.subr.mxu0 0.0
        %547 = vmatpush1.msra.mxu0 0.0
        %548 = vmatprep.subr.mxu0 0.0
        %549 = vmatpush1.msra.mxu0 0.0
        %550 = vmatprep.subr.mxu0 0.0
        %551 = vmatpush1.msra.mxu0 %v479
        %552 = vmatprep.subr.mxu0 0.0
        %553 = vmatpush2.msra.mxu0 0.0
        %554 = vmatprep.subr.mxu0 0.0
        %555 = vmatpush2.msra.mxu0 0.0
        %556 = vmatprep.subr.mxu0 0.0
        %557 = vmatpush2.msra.mxu0 0.0
        %558 = vmatprep.subr.mxu0 0.0
        %559 = vmatpush2.msra.mxu0 0.0
        %560 = vmatprep.subr.mxu0 0.0
        %561 = vmatpush2.msra.mxu0 0.0
        %562 = vmatprep.subr.mxu0 0.0
        %563 = vmatpush2.msra.mxu0 0.0
        %564 = vmatprep.subr.mxu0 0.0
        %565 = vmatpush2.msra.mxu0 0.0
        %566 = vmatprep.subr.mxu0 0.0
        %567 = vmatpush2.msra.mxu0 0.0
        %568 = vmatprep.subr.mxu0 0.0
        %569 = vmatpush2.msra.mxu0 0.0
        %570 = vmatprep.subr.mxu0 0.0
        %571 = vmatpush2.msra.mxu0 0.0
        %572 = vmatprep.subr.mxu0 0.0
        %573 = vmatpush2.msra.mxu0 0.0
        %574 = vmatprep.subr.mxu0 0.0
        %575 = vmatpush2.msra.mxu0 0.0
        %576 = vmatprep.subr.mxu0 0.0
        %577 = vmatpush2.msra.mxu0 0.0
        %578 = vmatprep.subr.mxu0 0.0
        %579 = vmatpush2.msra.mxu0 0.0
        %580 = vmatprep.subr.mxu0 0.0
        %581 = vmatpush2.msra.mxu0 0.0
        %582 = vmatprep.subr.mxu0 0.0
        %583 = vmatpush2.msra.mxu0 0.0
        %584 = vmatprep.mubr.f32.mxu0 0.0
        %585 = vmatmul.mubr.f32.gmra.mxu0 %v515
        %v586 = vpop.f32.mrf.mxu0
        %v587 = vadd.f32 %v512, %v586
        %v588 = vpop.f32.mrf.mxu0
        %589 = vmatprep.mubr.f32.mxu0 0.0
        %590 = vmatmul.mubr.f32.gmra.mxu0 %v518
        %v591 = vpop.f32.mrf.mxu0
        %v592 = vadd.f32 %v512, %v591
        %v593 = vpop.f32.mrf.mxu0
        %594 = vdwg.mxu0
        %v595 = vmax.f32 %v587, 0.0
        %v596 = vmax.f32 %v592, 0.0
        %v597 = vld [vmem:[%s413] sm:$0xff]
        %v598 = vld [vmem:[%s413 + $0x8] sm:$0xff]
        %s599 = scalar_lea.vmem %s413, 16 [#allocation2]
        %v600 = vld [vmem:[%s599] sm:$0xff]
        %v601 = vld [vmem:[%s599 + $0x8] sm:$0xff]
        %s602 = scalar_lea.vmem %s413, 32 [#allocation2]
        %v603 = vld [vmem:[%s602] sm:$0xff]
        %v604 = vld [vmem:[%s602 + $0x8] sm:$0xff]
        %v605 = vstv %s490
        %v606 = vmul.f32 %v597, %v605
        %v607 = vmul.f32 %v598, %v605
        %v608 = vstv %s491
        %v609 = vmul.f32 %v600, %v608
        %v610 = vmul.f32 %v601, %v608
        %v611 = vadd.f32 %v606, %v609
        %v612 = vadd.f32 %v607, %v610
        %v613 = vstv %s492
        %v614 = vmul.f32 %v603, %v613
        %v615 = vmul.f32 %v604, %v613
        %v616 = vadd.f32 %v611, %v614
        %v617 = vadd.f32 %v612, %v615
        %v618 = vstv %s499
        %v619 = vadd.f32 %v616, %v618
        %v620 = vadd.f32 %v617, %v618
        %v621 = vmax.f32 %v619, 0.0
        %v622 = vmax.f32 %v620, 0.0
        %v623 = vstv %s502
        %v624 = vmul.f32 %v621, %v623
        %v625 = vmul.f32 %v622, %v623
        %v626 = vstv %s493
        %v627 = vmul.f32 %v597, %v626
        %v628 = vmul.f32 %v598, %v626
        %v629 = vstv %s494
        %v630 = vmul.f32 %v600, %v629
        %v631 = vmul.f32 %v601, %v629
        %v632 = vadd.f32 %v627, %v630
        %v633 = vadd.f32 %v628, %v631
        %v634 = vstv %s495
        %v635 = vmul.f32 %v603, %v634
        %v636 = vmul.f32 %v604, %v634
        %v637 = vadd.f32 %v632, %v635
        %v638 = vadd.f32 %v633, %v636
        %v639 = vstv %s500
        %v640 = vadd.f32 %v637, %v639
        %v641 = vadd.f32 %v638, %v639
        %v642 = vmax.f32 %v640, 0.0
        %v643 = vmax.f32 %v641, 0.0
        %v644 = vstv %s503
        %v645 = vmul.f32 %v642, %v644
        %v646 = vmul.f32 %v643, %v644
        %v647 = vadd.f32 %v624, %v645
        %v648 = vadd.f32 %v625, %v646
        %v649 = vstv %s496
        %v650 = vmul.f32 %v597, %v649
        %v651 = vmul.f32 %v598, %v649
        %v652 = vstv %s497
        %v653 = vmul.f32 %v600, %v652
        %v654 = vmul.f32 %v601, %v652
        %v655 = vadd.f32 %v650, %v653
        %v656 = vadd.f32 %v651, %v654
        %v657 = vstv %s498
        %v658 = vmul.f32 %v603, %v657
        %v659 = vmul.f32 %v604, %v657
        %v660 = vadd.f32 %v655, %v658
        %v661 = vadd.f32 %v656, %v659
        %v662 = vstv %s501
        %v663 = vadd.f32 %v660, %v662
        %v664 = vadd.f32 %v661, %v662
        %v665 = vmax.f32 %v663, 0.0
        %v666 = vmax.f32 %v664, 0.0
        %v667 = vstv %s504
        %v668 = vmul.f32 %v665, %v667
        %v669 = vmul.f32 %v666, %v667
        %v670 = vadd.f32 %v647, %v668
        %v671 = vadd.f32 %v648, %v669
        %v672 = vstv %s505
        %v673 = vadd.f32 %v670, %v672
        %v674 = vadd.f32 %v671, %v672
        %v675 = vlaneseq
        %v676 = vshrl.u32 %v675, 7
        %v677 = vsub.s32 0, %v676
        %v678 = vrot.slane %v486, %v677
        %v680 = vsel %vm513, %v595, 0
        %v683 = vsel %vm513, %v596, 0
        %685 = vmatprep.subr.mxu0 0.0
        %686 = vmatpush1.msra.mxu0 0.0
        %687 = vmatprep.subr.mxu0 0.0
        %688 = vmatpush1.msra.mxu0 0.0
        %689 = vmatprep.subr.mxu0 0.0
        %690 = vmatpush1.msra.mxu0 0.0
        %691 = vmatprep.subr.mxu0 0.0
        %692 = vmatpush1.msra.mxu0 0.0
        %693 = vmatprep.subr.mxu0 0.0
        %694 = vmatpush1.msra.mxu0 0.0
        %695 = vmatprep.subr.mxu0 0.0
        %696 = vmatpush1.msra.mxu0 0.0
        %697 = vmatprep.subr.mxu0 0.0
        %698 = vmatpush1.msra.mxu0 0.0
        %699 = vmatprep.subr.mxu0 0.0
        %700 = vmatpush1.msra.mxu0 0.0
        %701 = vmatprep.subr.mxu0 0.0
        %702 = vmatpush1.msra.mxu0 0.0
        %703 = vmatprep.subr.mxu0 0.0
        %704 = vmatpush1.msra.mxu0 0.0
        %705 = vmatprep.subr.mxu0 0.0
        %706 = vmatpush1.msra.mxu0 0.0
        %707 = vmatprep.subr.mxu0 0.0
        %708 = vmatpush1.msra.mxu0 0.0
        %709 = vmatprep.subr.mxu0 0.0
        %710 = vmatpush1.msra.mxu0 0.0
        %711 = vmatprep.subr.mxu0 0.0
        %712 = vmatpush1.msra.mxu0 0.0
        %713 = vmatprep.subr.mxu0 0.0
        %714 = vmatpush1.msra.mxu0 0.0
        %715 = vmatprep.subr.mxu0 0.0
        %716 = vmatpush1.msra.mxu0 %v480
        %717 = vmatprep.subr.mxu0 0.0
        %718 = vmatpush2.msra.mxu0 0.0
        %719 = vmatprep.subr.mxu0 0.0
        %720 = vmatpush2.msra.mxu0 0.0
        %721 = vmatprep.subr.mxu0 0.0
        %722 = vmatpush2.msra.mxu0 0.0
        %723 = vmatprep.subr.mxu0 0.0
        %724 = vmatpush2.msra.mxu0 0.0
        %725 = vmatprep.subr.mxu0 0.0
        %726 = vmatpush2.msra.mxu0 0.0
        %727 = vmatprep.subr.mxu0 0.0
        %728 = vmatpush2.msra.mxu0 0.0
        %729 = vmatprep.subr.mxu0 0.0
        %730 = vmatpush2.msra.mxu0 0.0
        %731 = vmatprep.subr.mxu0 0.0
        %732 = vmatpush2.msra.mxu0 0.0
        %733 = vmatprep.subr.mxu0 0.0
        %734 = vmatpush2.msra.mxu0 0.0
        %735 = vmatprep.subr.mxu0 0.0
        %736 = vmatpush2.msra.mxu0 0.0
        %737 = vmatprep.subr.mxu0 0.0
        %738 = vmatpush2.msra.mxu0 0.0
        %739 = vmatprep.subr.mxu0 0.0
        %740 = vmatpush2.msra.mxu0 0.0
        %741 = vmatprep.subr.mxu0 0.0
        %742 = vmatpush2.msra.mxu0 0.0
        %743 = vmatprep.subr.mxu0 0.0
        %744 = vmatpush2.msra.mxu0 0.0
        %745 = vmatprep.subr.mxu0 0.0
        %746 = vmatpush2.msra.mxu0 0.0
        %747 = vmatprep.subr.mxu0 0.0
        %748 = vmatpush2.msra.mxu0 0.0
        %749 = vmatprep.mubr.f32.mxu0 0.0
        %750 = vmatmul.mubr.f32.gmra.mxu0 %v680
        %v751 = vpop.f32.mrf.mxu0
        %v752 = vadd.f32 %v678, %v751
        %v753 = vpop.f32.mrf.mxu0
        %754 = vmatprep.mubr.f32.mxu0 0.0
        %755 = vmatmul.mubr.f32.gmra.mxu0 %v683
        %v756 = vpop.f32.mrf.mxu0
        %v757 = vadd.f32 %v678, %v756
        %v758 = vpop.f32.mrf.mxu0
        %759 = vdwg.mxu0
        %v760 = vlaneseq
        %v761 = vshrl.u32 %v760, 7
        %v762 = vsub.s32 0, %v761
        %v763 = vrot.slane %v487, %v762
        %764 = vmatprep.subr.mxu0 0.0
        %765 = vmatpush1.msra.mxu0 0.0
        %766 = vmatprep.subr.mxu0 0.0
        %767 = vmatpush1.msra.mxu0 0.0
        %768 = vmatprep.subr.mxu0 0.0
        %769 = vmatpush1.msra.mxu0 0.0
        %770 = vmatprep.subr.mxu0 0.0
        %771 = vmatpush1.msra.mxu0 0.0
        %772 = vmatprep.subr.mxu0 0.0
        %773 = vmatpush1.msra.mxu0 0.0
        %774 = vmatprep.subr.mxu0 0.0
        %775 = vmatpush1.msra.mxu0 0.0
        %776 = vmatprep.subr.mxu0 0.0
        %777 = vmatpush1.msra.mxu0 0.0
        %778 = vmatprep.subr.mxu0 0.0
        %779 = vmatpush1.msra.mxu0 0.0
        %780 = vmatprep.subr.mxu0 0.0
        %781 = vmatpush1.msra.mxu0 0.0
        %782 = vmatprep.subr.mxu0 0.0
        %783 = vmatpush1.msra.mxu0 0.0
        %784 = vmatprep.subr.mxu0 0.0
        %785 = vmatpush1.msra.mxu0 0.0
        %786 = vmatprep.subr.mxu0 0.0
        %787 = vmatpush1.msra.mxu0 0.0
        %788 = vmatprep.subr.mxu0 0.0
        %789 = vmatpush1.msra.mxu0 0.0
        %790 = vmatprep.subr.mxu0 0.0
        %791 = vmatpush1.msra.mxu0 0.0
        %792 = vmatprep.subr.mxu0 0.0
        %793 = vmatpush1.msra.mxu0 0.0
        %794 = vmatprep.subr.mxu0 0.0
        %795 = vmatpush1.msra.mxu0 %v481
        %796 = vmatprep.subr.mxu0 0.0
        %797 = vmatpush2.msra.mxu0 0.0
        %798 = vmatprep.subr.mxu0 0.0
        %799 = vmatpush2.msra.mxu0 0.0
        %800 = vmatprep.subr.mxu0 0.0
        %801 = vmatpush2.msra.mxu0 0.0
        %802 = vmatprep.subr.mxu0 0.0
        %803 = vmatpush2.msra.mxu0 0.0
        %804 = vmatprep.subr.mxu0 0.0
        %805 = vmatpush2.msra.mxu0 0.0
        %806 = vmatprep.subr.mxu0 0.0
        %807 = vmatpush2.msra.mxu0 0.0
        %808 = vmatprep.subr.mxu0 0.0
        %809 = vmatpush2.msra.mxu0 0.0
        %810 = vmatprep.subr.mxu0 0.0
        %811 = vmatpush2.msra.mxu0 0.0
        %812 = vmatprep.subr.mxu0 0.0
        %813 = vmatpush2.msra.mxu0 0.0
        %814 = vmatprep.subr.mxu0 0.0
        %815 = vmatpush2.msra.mxu0 0.0
        %816 = vmatprep.subr.mxu0 0.0
        %817 = vmatpush2.msra.mxu0 0.0
        %818 = vmatprep.subr.mxu0 0.0
        %819 = vmatpush2.msra.mxu0 0.0
        %820 = vmatprep.subr.mxu0 0.0
        %821 = vmatpush2.msra.mxu0 0.0
        %822 = vmatprep.subr.mxu0 0.0
        %823 = vmatpush2.msra.mxu0 0.0
        %824 = vmatprep.subr.mxu0 0.0
        %825 = vmatpush2.msra.mxu0 0.0
        %826 = vmatprep.subr.mxu0 0.0
        %827 = vmatpush2.msra.mxu0 0.0
        %828 = vmatprep.mubr.f32.mxu0 0.0
        %829 = vmatmul.mubr.f32.gmra.mxu0 %v680
        %v830 = vpop.f32.mrf.mxu0
        %v831 = vadd.f32 %v763, %v830
        %v832 = vpop.f32.mrf.mxu0
        %833 = vmatprep.mubr.f32.mxu0 0.0
        %834 = vmatmul.mubr.f32.gmra.mxu0 %v683
        %v835 = vpop.f32.mrf.mxu0
        %v836 = vadd.f32 %v763, %v835
        %v837 = vpop.f32.mrf.mxu0
        %838 = vdwg.mxu0
        %vm839 = vcmask 31744
        %v841 = vsel %vm839, %v752, 0
        %v844 = vsel %vm839, %v757, 0
        %v847 = vsel %vm839, %v831, 0
        %v850 = vsel %vm839, %v836, 0
        %852 = vmatprep.subr.mxu0 0.0
        %853 = vmatpush1.xpose.msra.mxu0 0.0
        %854 = vmatprep.subr.mxu0 0.0
        %855 = vmatpush1.xpose.msra.mxu0 0.0
        %856 = vmatprep.subr.mxu0 0.0
        %857 = vmatpush1.xpose.msra.mxu0 0.0
        %858 = vmatprep.subr.mxu0 0.0
        %859 = vmatpush1.xpose.msra.mxu0 0.0
        %860 = vmatprep.subr.mxu0 0.0
        %861 = vmatpush1.xpose.msra.mxu0 0.0
        %862 = vmatprep.subr.mxu0 0.0
        %863 = vmatpush1.xpose.msra.mxu0 0.0
        %864 = vmatprep.subr.mxu0 0.0
        %865 = vmatpush1.xpose.msra.mxu0 0.0
        %866 = vmatprep.subr.mxu0 0.0
        %867 = vmatpush1.xpose.msra.mxu0 0.0
        %868 = vmatprep.subr.mxu0 0.0
        %869 = vmatpush1.xpose.msra.mxu0 0.0
        %870 = vmatprep.subr.mxu0 0.0
        %871 = vmatpush1.xpose.msra.mxu0 0.0
        %872 = vmatprep.subr.mxu0 0.0
        %873 = vmatpush1.xpose.msra.mxu0 0.0
        %874 = vmatprep.subr.mxu0 0.0
        %875 = vmatpush1.xpose.msra.mxu0 0.0
        %876 = vmatprep.subr.mxu0 0.0
        %877 = vmatpush1.xpose.msra.mxu0 0.0
        %878 = vmatprep.subr.mxu0 0.0
        %879 = vmatpush1.xpose.msra.mxu0 0.0
        %880 = vmatprep.subr.mxu0 0.0
        %881 = vmatpush1.xpose.msra.mxu0 %v850
        %882 = vmatprep.subr.mxu0 0.0
        %883 = vmatpush1.xpose.msra.mxu0 %v847
        %884 = vmatprep.subr.mxu0 0.0
        %885 = vmatpush2.xpose.msra.mxu0 0.0
        %886 = vmatprep.subr.mxu0 0.0
        %887 = vmatpush2.xpose.msra.mxu0 0.0
        %888 = vmatprep.subr.mxu0 0.0
        %889 = vmatpush2.xpose.msra.mxu0 0.0
        %890 = vmatprep.subr.mxu0 0.0
        %891 = vmatpush2.xpose.msra.mxu0 0.0
        %892 = vmatprep.subr.mxu0 0.0
        %893 = vmatpush2.xpose.msra.mxu0 0.0
        %894 = vmatprep.subr.mxu0 0.0
        %895 = vmatpush2.xpose.msra.mxu0 0.0
        %896 = vmatprep.subr.mxu0 0.0
        %897 = vmatpush2.xpose.msra.mxu0 0.0
        %898 = vmatprep.subr.mxu0 0.0
        %899 = vmatpush2.xpose.msra.mxu0 0.0
        %900 = vmatprep.subr.mxu0 0.0
        %901 = vmatpush2.xpose.msra.mxu0 0.0
        %902 = vmatprep.subr.mxu0 0.0
        %903 = vmatpush2.xpose.msra.mxu0 0.0
        %904 = vmatprep.subr.mxu0 0.0
        %905 = vmatpush2.xpose.msra.mxu0 0.0
        %906 = vmatprep.subr.mxu0 0.0
        %907 = vmatpush2.xpose.msra.mxu0 0.0
        %908 = vmatprep.subr.mxu0 0.0
        %909 = vmatpush2.xpose.msra.mxu0 0.0
        %910 = vmatprep.subr.mxu0 0.0
        %911 = vmatpush2.xpose.msra.mxu0 0.0
        %912 = vmatprep.subr.mxu0 0.0
        %913 = vmatpush2.xpose.msra.mxu0 0.0
        %914 = vmatprep.subr.mxu0 0.0
        %915 = vmatpush2.xpose.msra.mxu0 0.0
        %916 = vmatprep.mubr.f32.mxu0 0.0
        %917 = vmatmul.mubr.f32.gmra.mxu0 %v841
        %v918 = vpop.f32.mrf.mxu0
        %v919 = vadd.f32 %v673, %v918
        %v920 = vpop.f32.mrf.mxu0
        %921 = vmatprep.mubr.f32.mxu0 0.0
        %922 = vmatmul.mubr.f32.gmra.mxu0 %v844
        %v923 = vpop.f32.mrf.mxu0
        %v924 = vadd.f32 %v674, %v923
        %v925 = vpop.f32.mrf.mxu0
        %926 = vdwg.mxu0
        %vm927 = vcmask 130048
        %v928 = vsel %vm927, %v919, -inf
        %929 = vmax.xlane.f32.xlu0 %v928
        %v930 = vpop.xlane.xlu0 %929
        %v931 = vsel %vm927, %v924, -inf
        %932 = vmax.xlane.f32.xlu0 %v931
        %v933 = vpop.xlane.xlu0 %932
        %v934 = vsub.f32 %v919, %v930
        %v935 = vsub.f32 %v924, %v933
        %v936 = vmul.f32 %v934, 1.442695
        %v937 = vpow.pop %v936
        %v938 = vmul.f32 %v935, 1.442695
        %v939 = vpow.pop %v938
        %v940 = vsel %vm927, %v937, 0.0
        %941 = vadd.xlane.f32.xlu0 %v940
        %v942 = vpop.xlane.xlu0 %941
        %v943 = vsel %vm927, %v939, 0.0
        %944 = vadd.xlane.f32.xlu0 %v943
        %v945 = vpop.xlane.xlu0 %944
        %v946 = vrcp.pop %v942
        %v947 = vrcp.pop %v945
        %v948 = vmul.f32 %v937, %v946
        %v949 = vmul.f32 %v939, %v947
        %950 = vst.msk [vmem:[%s468] sm:$0xff] %vm927, %v948
        %951 = vst.msk [vmem:[%s468 + $0x8] sm:$0xff] %vm927, %v949
        %952 = vrot.lane.b32.xlu0 %v752, 124
        %v953 = vpop.permute.xlu0 %952
        %954 = vrot.lane.b32.xlu0 %v757, 124
        %v955 = vpop.permute.xlu0 %954
        %956 = vrot.lane.b32.xlu0 %v831, 124
        %v957 = vpop.permute.xlu0 %956
        %958 = vrot.lane.b32.xlu0 %v836, 124
        %v959 = vpop.permute.xlu0 %958
        %v960 = vsel %vm839, %v953, 0
        %v962 = vsel %vm839, %v955, 0
        %v964 = vsel %vm839, %v957, 0
        %v966 = vsel %vm839, %v959, 0
        %968 = vmatprep.subr.mxu0 0.0
        %969 = vmatpush1.xpose.msra.mxu0 0.0
        %970 = vmatprep.subr.mxu0 0.0
        %971 = vmatpush1.xpose.msra.mxu0 0.0
        %972 = vmatprep.subr.mxu0 0.0
        %973 = vmatpush1.xpose.msra.mxu0 0.0
        %974 = vmatprep.subr.mxu0 0.0
        %975 = vmatpush1.xpose.msra.mxu0 0.0
        %976 = vmatprep.subr.mxu0 0.0
        %977 = vmatpush1.xpose.msra.mxu0 0.0
        %978 = vmatprep.subr.mxu0 0.0
        %979 = vmatpush1.xpose.msra.mxu0 0.0
        %980 = vmatprep.subr.mxu0 0.0
        %981 = vmatpush1.xpose.msra.mxu0 0.0
        %982 = vmatprep.subr.mxu0 0.0
        %983 = vmatpush1.xpose.msra.mxu0 0.0
        %984 = vmatprep.subr.mxu0 0.0
        %985 = vmatpush1.xpose.msra.mxu0 0.0
        %986 = vmatprep.subr.mxu0 0.0
        %987 = vmatpush1.xpose.msra.mxu0 0.0
        %988 = vmatprep.subr.mxu0 0.0
        %989 = vmatpush1.xpose.msra.mxu0 0.0
        %990 = vmatprep.subr.mxu0 0.0
        %991 = vmatpush1.xpose.msra.mxu0 0.0
        %992 = vmatprep.subr.mxu0 0.0
        %993 = vmatpush1.xpose.msra.mxu0 0.0
        %994 = vmatprep.subr.mxu0 0.0
        %995 = vmatpush1.xpose.msra.mxu0 0.0
        %996 = vmatprep.subr.mxu0 0.0
        %997 = vmatpush1.xpose.msra.mxu0 %v966
        %998 = vmatprep.subr.mxu0 0.0
        %999 = vmatpush1.xpose.msra.mxu0 %v964
        %1000 = vmatprep.subr.mxu0 0.0
        %1001 = vmatpush2.xpose.msra.mxu0 0.0
        %1002 = vmatprep.subr.mxu0 0.0
        %1003 = vmatpush2.xpose.msra.mxu0 0.0
        %1004 = vmatprep.subr.mxu0 0.0
        %1005 = vmatpush2.xpose.msra.mxu0 0.0
        %1006 = vmatprep.subr.mxu0 0.0
        %1007 = vmatpush2.xpose.msra.mxu0 0.0
        %1008 = vmatprep.subr.mxu0 0.0
        %1009 = vmatpush2.xpose.msra.mxu0 0.0
        %1010 = vmatprep.subr.mxu0 0.0
        %1011 = vmatpush2.xpose.msra.mxu0 0.0
        %1012 = vmatprep.subr.mxu0 0.0
        %1013 = vmatpush2.xpose.msra.mxu0 0.0
        %1014 = vmatprep.subr.mxu0 0.0
        %1015 = vmatpush2.xpose.msra.mxu0 0.0
        %1016 = vmatprep.subr.mxu0 0.0
        %1017 = vmatpush2.xpose.msra.mxu0 0.0
        %1018 = vmatprep.subr.mxu0 0.0
        %1019 = vmatpush2.xpose.msra.mxu0 0.0
        %1020 = vmatprep.subr.mxu0 0.0
        %1021 = vmatpush2.xpose.msra.mxu0 0.0
        %1022 = vmatprep.subr.mxu0 0.0
        %1023 = vmatpush2.xpose.msra.mxu0 0.0
        %1024 = vmatprep.subr.mxu0 0.0
        %1025 = vmatpush2.xpose.msra.mxu0 0.0
        %1026 = vmatprep.subr.mxu0 0.0
        %1027 = vmatpush2.xpose.msra.mxu0 0.0
        %1028 = vmatprep.subr.mxu0 0.0
        %1029 = vmatpush2.xpose.msra.mxu0 0.0
        %1030 = vmatprep.subr.mxu0 0.0
        %1031 = vmatpush2.xpose.msra.mxu0 0.0
        %1032 = vmatprep.mubr.f32.mxu0 0.0
        %1033 = vmatmul.mubr.f32.gmra.mxu0 %v960
        %v1034 = vpop.f32.mrf.mxu0
        %v1035 = vadd.f32 %v673, %v1034
        %v1036 = vpop.f32.mrf.mxu0
        %1037 = vmatprep.mubr.f32.mxu0 0.0
        %1038 = vmatmul.mubr.f32.gmra.mxu0 %v962
        %v1039 = vpop.f32.mrf.mxu0
        %v1040 = vadd.f32 %v674, %v1039
        %v1041 = vpop.f32.mrf.mxu0
        %1042 = vdwg.mxu0
        %v1043 = vsel %vm927, %v1035, -inf
        %1044 = vmax.xlane.f32.xlu0 %v1043
        %v1045 = vpop.xlane.xlu0 %1044
        %v1046 = vsel %vm927, %v1040, -inf
        %1047 = vmax.xlane.f32.xlu0 %v1046
        %v1048 = vpop.xlane.xlu0 %1047
        %v1049 = vsub.f32 %v1035, %v1045
        %v1050 = vsub.f32 %v1040, %v1048
        %v1051 = vmul.f32 %v1049, 1.442695
        %v1052 = vpow.pop %v1051
        %v1053 = vmul.f32 %v1050, 1.442695
        %v1054 = vpow.pop %v1053
        %v1055 = vsel %vm927, %v1052, 0.0
        %1056 = vadd.xlane.f32.xlu0 %v1055
        %v1057 = vpop.xlane.xlu0 %1056
        %v1058 = vsel %vm927, %v1054, 0.0
        %1059 = vadd.xlane.f32.xlu0 %v1058
        %v1060 = vpop.xlane.xlu0 %1059
        %v1061 = vrcp.pop %v1057
        %v1062 = vrcp.pop %v1060
        %v1063 = vmul.f32 %v1052, %v1061
        %v1064 = vmul.f32 %v1054, %v1062
        %s1065 = scalar_lea.vmem %s468, 16 [#allocation7]
        %1066 = vst.msk [vmem:[%s1065] sm:$0xff] %vm927, %v1063
        %1067 = vst.msk [vmem:[%s1065 + $0x8] sm:$0xff] %vm927, %v1064
        %1069 = vset.pattern.permute.xlu0 0
        %1070 = vperm.xlu0 %1069, %v489
        %v1071 = vpop.permute.xlu0 %1070
        %v1074 = vsel %vm927, %v482, 0
        %1076 = vmatprep.subr.mxu0 0.0
        %1077 = vmatpush1.msra.mxu0 0.0
        %1078 = vmatprep.subr.mxu0 0.0
        %1079 = vmatpush1.msra.mxu0 0.0
        %1080 = vmatprep.subr.mxu0 0.0
        %1081 = vmatpush1.msra.mxu0 0.0
        %1082 = vmatprep.subr.mxu0 0.0
        %1083 = vmatpush1.msra.mxu0 0.0
        %1084 = vmatprep.subr.mxu0 0.0
        %1085 = vmatpush1.msra.mxu0 0.0
        %1086 = vmatprep.subr.mxu0 0.0
        %1087 = vmatpush1.msra.mxu0 0.0
        %1088 = vmatprep.subr.mxu0 0.0
        %1089 = vmatpush1.msra.mxu0 0.0
        %1090 = vmatprep.subr.mxu0 0.0
        %1091 = vmatpush1.msra.mxu0 0.0
        %1092 = vmatprep.subr.mxu0 0.0
        %1093 = vmatpush1.msra.mxu0 0.0
        %1094 = vmatprep.subr.mxu0 0.0
        %1095 = vmatpush1.msra.mxu0 0.0
        %1096 = vmatprep.subr.mxu0 0.0
        %1097 = vmatpush1.msra.mxu0 0.0
        %1098 = vmatprep.subr.mxu0 0.0
        %1099 = vmatpush1.msra.mxu0 0.0
        %1100 = vmatprep.subr.mxu0 0.0
        %1101 = vmatpush1.msra.mxu0 0.0
        %1102 = vmatprep.subr.mxu0 0.0
        %1103 = vmatpush1.msra.mxu0 0.0
        %1104 = vmatprep.subr.mxu0 0.0
        %1105 = vmatpush1.msra.mxu0 %v596
        %1106 = vmatprep.subr.mxu0 0.0
        %1107 = vmatpush1.msra.mxu0 %v595
        %1108 = vmatprep.subr.mxu0 0.0
        %1109 = vmatpush2.msra.mxu0 0.0
        %1110 = vmatprep.subr.mxu0 0.0
        %1111 = vmatpush2.msra.mxu0 0.0
        %1112 = vmatprep.subr.mxu0 0.0
        %1113 = vmatpush2.msra.mxu0 0.0
        %1114 = vmatprep.subr.mxu0 0.0
        %1115 = vmatpush2.msra.mxu0 0.0
        %1116 = vmatprep.subr.mxu0 0.0
        %1117 = vmatpush2.msra.mxu0 0.0
        %1118 = vmatprep.subr.mxu0 0.0
        %1119 = vmatpush2.msra.mxu0 0.0
        %1120 = vmatprep.subr.mxu0 0.0
        %1121 = vmatpush2.msra.mxu0 0.0
        %1122 = vmatprep.subr.mxu0 0.0
        %1123 = vmatpush2.msra.mxu0 0.0
        %1124 = vmatprep.subr.mxu0 0.0
        %1125 = vmatpush2.msra.mxu0 0.0
        %1126 = vmatprep.subr.mxu0 0.0
        %1127 = vmatpush2.msra.mxu0 0.0
        %1128 = vmatprep.subr.mxu0 0.0
        %1129 = vmatpush2.msra.mxu0 0.0
        %1130 = vmatprep.subr.mxu0 0.0
        %1131 = vmatpush2.msra.mxu0 0.0
        %1132 = vmatprep.subr.mxu0 0.0
        %1133 = vmatpush2.msra.mxu0 0.0
        %1134 = vmatprep.subr.mxu0 0.0
        %1135 = vmatpush2.msra.mxu0 0.0
        %1136 = vmatprep.subr.mxu0 0.0
        %1137 = vmatpush2.msra.mxu0 0.0
        %1138 = vmatprep.subr.mxu0 0.0
        %1139 = vmatpush2.msra.mxu0 0.0
        %1140 = vmatprep.mubr.f32.mxu0 0.0
        %1141 = vmatmul.mubr.f32.gmra.mxu0 %v1074
        %v1142 = vpop.f32.mrf.mxu0
        %v1143 = vadd.f32 %v1071, %v1142
        %v1144 = vpop.f32.mrf.mxu0
        %1145 = vdwg.mxu0
        %v1146 = vmax.f32 %v1143, 0.0
        %1147 = vset.pattern.permute.xlu0 1
        %1148 = vperm.xlu0 %1147, %v489
        %v1149 = vpop.permute.xlu0 %1148
        %v1152 = vsel %vm927, %v483, 0
        %1154 = vmatprep.subr.mxu0 0.0
        %1155 = vmatpush1.msra.mxu0 0.0
        %1156 = vmatprep.subr.mxu0 0.0
        %1157 = vmatpush1.msra.mxu0 0.0
        %1158 = vmatprep.subr.mxu0 0.0
        %1159 = vmatpush1.msra.mxu0 0.0
        %1160 = vmatprep.subr.mxu0 0.0
        %1161 = vmatpush1.msra.mxu0 0.0
        %1162 = vmatprep.subr.mxu0 0.0
        %1163 = vmatpush1.msra.mxu0 0.0
        %1164 = vmatprep.subr.mxu0 0.0
        %1165 = vmatpush1.msra.mxu0 0.0
        %1166 = vmatprep.subr.mxu0 0.0
        %1167 = vmatpush1.msra.mxu0 0.0
        %1168 = vmatprep.subr.mxu0 0.0
        %1169 = vmatpush1.msra.mxu0 0.0
        %1170 = vmatprep.subr.mxu0 0.0
        %1171 = vmatpush1.msra.mxu0 0.0
        %1172 = vmatprep.subr.mxu0 0.0
        %1173 = vmatpush1.msra.mxu0 0.0
        %1174 = vmatprep.subr.mxu0 0.0
        %1175 = vmatpush1.msra.mxu0 0.0
        %1176 = vmatprep.subr.mxu0 0.0
        %1177 = vmatpush1.msra.mxu0 0.0
        %1178 = vmatprep.subr.mxu0 0.0
        %1179 = vmatpush1.msra.mxu0 0.0
        %1180 = vmatprep.subr.mxu0 0.0
        %1181 = vmatpush1.msra.mxu0 0.0
        %1182 = vmatprep.subr.mxu0 0.0
        %1183 = vmatpush1.msra.mxu0 %v596
        %1184 = vmatprep.subr.mxu0 0.0
        %1185 = vmatpush1.msra.mxu0 %v595
        %1186 = vmatprep.subr.mxu0 0.0
        %1187 = vmatpush2.msra.mxu0 0.0
        %1188 = vmatprep.subr.mxu0 0.0
        %1189 = vmatpush2.msra.mxu0 0.0
        %1190 = vmatprep.subr.mxu0 0.0
        %1191 = vmatpush2.msra.mxu0 0.0
        %1192 = vmatprep.subr.mxu0 0.0
        %1193 = vmatpush2.msra.mxu0 0.0
        %1194 = vmatprep.subr.mxu0 0.0
        %1195 = vmatpush2.msra.mxu0 0.0
        %1196 = vmatprep.subr.mxu0 0.0
        %1197 = vmatpush2.msra.mxu0 0.0
        %1198 = vmatprep.subr.mxu0 0.0
        %1199 = vmatpush2.msra.mxu0 0.0
        %1200 = vmatprep.subr.mxu0 0.0
        %1201 = vmatpush2.msra.mxu0 0.0
        %1202 = vmatprep.subr.mxu0 0.0
        %1203 = vmatpush2.msra.mxu0 0.0
        %1204 = vmatprep.subr.mxu0 0.0
        %1205 = vmatpush2.msra.mxu0 0.0
        %1206 = vmatprep.subr.mxu0 0.0
        %1207 = vmatpush2.msra.mxu0 0.0
        %1208 = vmatprep.subr.mxu0 0.0
        %1209 = vmatpush2.msra.mxu0 0.0
        %1210 = vmatprep.subr.mxu0 0.0
        %1211 = vmatpush2.msra.mxu0 0.0
        %1212 = vmatprep.subr.mxu0 0.0
        %1213 = vmatpush2.msra.mxu0 0.0
        %1214 = vmatprep.subr.mxu0 0.0
        %1215 = vmatpush2.msra.mxu0 0.0
        %1216 = vmatprep.subr.mxu0 0.0
        %1217 = vmatpush2.msra.mxu0 0.0
        %1218 = vmatprep.mubr.f32.mxu0 0.0
        %1219 = vmatmul.mubr.f32.gmra.mxu0 %v1152
        %v1220 = vpop.f32.mrf.mxu0
        %v1221 = vadd.f32 %v1149, %v1220
        %v1222 = vpop.f32.mrf.mxu0
        %1223 = vdwg.mxu0
        %v1224 = vmax.f32 %v1221, 0.0
        %1225 = vxpose.xlu0.b32.start [1/16] %v1224, 128
        %1226 = vxpose.xlu0.b32.cont [2/16] 0.0, 128
        %1227 = vxpose.xlu0.b32.cont [3/16] 0.0, 128
        %1228 = vxpose.xlu0.b32.cont [4/16] 0.0, 128
        %1229 = vxpose.xlu0.b32.cont [5/16] 0.0, 128
        %1230 = vxpose.xlu0.b32.cont [6/16] 0.0, 128
        %1231 = vxpose.xlu0.b32.cont [7/16] 0.0, 128
        %1232 = vxpose.xlu0.b32.cont [8/16] 0.0, 128
        %1233 = vxpose.xlu0.b32.cont [9/16] 0.0, 128
        %1234 = vxpose.xlu0.b32.cont [10/16] 0.0, 128
        %1235 = vxpose.xlu0.b32.cont [11/16] 0.0, 128
        %1236 = vxpose.xlu0.b32.cont [12/16] 0.0, 128
        %1237 = vxpose.xlu0.b32.cont [13/16] 0.0, 128
        %1238 = vxpose.xlu0.b32.cont [14/16] 0.0, 128
        %1239 = vxpose.xlu0.b32.cont [15/16] 0.0, 128
        %1240 = vxpose.xlu0.b32.end [16/16] 0.0, 128
        %v1241 = vpop.trf.xlu0
        %v1242 = vpop.trf.xlu0
        %v1243 = vpop.trf.xlu0
        %v1244 = vpop.trf.xlu0
        %v1245 = vpop.trf.xlu0
        %v1246 = vpop.trf.xlu0
        %v1247 = vpop.trf.xlu0
        %v1248 = vpop.trf.xlu0
        %v1249 = vpop.trf.xlu0
        %v1250 = vpop.trf.xlu0
        %v1251 = vpop.trf.xlu0
        %v1252 = vpop.trf.xlu0
        %v1253 = vpop.trf.xlu0
        %v1254 = vpop.trf.xlu0
        %v1255 = vpop.trf.xlu0
        %v1256 = vpop.trf.xlu0
        %vm1257 = vcmask 15360
        %v1259 = vsel %vm1257, %v1241, 0
        %vm1261 = vcmask 1041408
        %v1263 = vsel %vm1261, %v1146, 0
        %1265 = vmatprep.subr.mxu0 0.0
        %1266 = vmatpush1.msra.mxu0 0.0
        %1267 = vmatprep.subr.mxu0 0.0
        %1268 = vmatpush1.msra.mxu0 0.0
        %1269 = vmatprep.subr.mxu0 0.0
        %1270 = vmatpush1.msra.mxu0 0.0
        %1271 = vmatprep.subr.mxu0 0.0
        %1272 = vmatpush1.msra.mxu0 0.0
        %1273 = vmatprep.subr.mxu0 0.0
        %1274 = vmatpush1.msra.mxu0 0.0
        %1275 = vmatprep.subr.mxu0 0.0
        %1276 = vmatpush1.msra.mxu0 0.0
        %1277 = vmatprep.subr.mxu0 0.0
        %1278 = vmatpush1.msra.mxu0 0.0
        %1279 = vmatprep.subr.mxu0 0.0
        %1280 = vmatpush1.msra.mxu0 0.0
        %1281 = vmatprep.subr.mxu0 0.0
        %1282 = vmatpush1.msra.mxu0 0.0
        %1283 = vmatprep.subr.mxu0 0.0
        %1284 = vmatpush1.msra.mxu0 0.0
        %1285 = vmatprep.subr.mxu0 0.0
        %1286 = vmatpush1.msra.mxu0 0.0
        %1287 = vmatprep.subr.mxu0 0.0
        %1288 = vmatpush1.msra.mxu0 0.0
        %1289 = vmatprep.subr.mxu0 0.0
        %1290 = vmatpush1.msra.mxu0 0.0
        %1291 = vmatprep.subr.mxu0 0.0
        %1292 = vmatpush1.msra.mxu0 0.0
        %1293 = vmatprep.subr.mxu0 0.0
        %1294 = vmatpush1.msra.mxu0 0.0
        %1295 = vmatprep.subr.mxu0 0.0
        %1296 = vmatpush1.msra.mxu0 %v1263
        %1297 = vmatprep.subr.mxu0 0.0
        %1298 = vmatpush2.msra.mxu0 0.0
        %1299 = vmatprep.subr.mxu0 0.0
        %1300 = vmatpush2.msra.mxu0 0.0
        %1301 = vmatprep.subr.mxu0 0.0
        %1302 = vmatpush2.msra.mxu0 0.0
        %1303 = vmatprep.subr.mxu0 0.0
        %1304 = vmatpush2.msra.mxu0 0.0
        %1305 = vmatprep.subr.mxu0 0.0
        %1306 = vmatpush2.msra.mxu0 0.0
        %1307 = vmatprep.subr.mxu0 0.0
        %1308 = vmatpush2.msra.mxu0 0.0
        %1309 = vmatprep.subr.mxu0 0.0
        %1310 = vmatpush2.msra.mxu0 0.0
        %1311 = vmatprep.subr.mxu0 0.0
        %1312 = vmatpush2.msra.mxu0 0.0
        %1313 = vmatprep.subr.mxu0 0.0
        %1314 = vmatpush2.msra.mxu0 0.0
        %1315 = vmatprep.subr.mxu0 0.0
        %1316 = vmatpush2.msra.mxu0 0.0
        %1317 = vmatprep.subr.mxu0 0.0
        %1318 = vmatpush2.msra.mxu0 0.0
        %1319 = vmatprep.subr.mxu0 0.0
        %1320 = vmatpush2.msra.mxu0 0.0
        %1321 = vmatprep.subr.mxu0 0.0
        %1322 = vmatpush2.msra.mxu0 0.0
        %1323 = vmatprep.subr.mxu0 0.0
        %1324 = vmatpush2.msra.mxu0 0.0
        %1325 = vmatprep.subr.mxu0 0.0
        %1326 = vmatpush2.msra.mxu0 0.0
        %1327 = vmatprep.subr.mxu0 0.0
        %1328 = vmatpush2.msra.mxu0 0.0
        %1329 = vmatprep.mubr.f32.mxu0 0.0
        %1330 = vmatmul.mubr.f32.gmra.mxu0 %v1259
        %v1331 = vpop.f32.mrf.mxu0
        %v1332 = vadd.f32 0.0, %v1331
        %v1333 = vpop.f32.mrf.mxu0
        %1334 = vdwg.mxu0
        %v1335 = vsel %vm513, %v1332, -inf
        %1336 = vmax.xlane.f32.xlu0 %v1335
        %v1337 = vpop.xlane.xlu0 %1336
        %v1338 = vsub.f32 %v1337, %v1332
        %v1339 = vsel %vm513, %v1338, -inf
        %1340 = vmax.xlane.f32.xlu0 %v1339
        %v1341 = vpop.xlane.xlu0 %1340
        %v1342 = vsub.f32 %v1338, %v1341
        %v1343 = vmul.f32 %v1342, 1.442695
        %v1344 = vpow.pop %v1343
        %v1345 = vsel %vm513, %v1344, 0.0
        %1346 = vadd.xlane.f32.xlu0 %v1345
        %v1347 = vpop.xlane.xlu0 %1346
        %v1348 = vrcp.pop %v1347
        %v1349 = vmul.f32 %v1344, %v1348
        %v1350 = vlaneseq
        %v1351 = vshrl.u32 %v1350, 7
        %v1352 = vsub.s32 0, %v1351
        %v1353 = vrot.slane %v488, %v1352
        %1354 = vmatprep.subr.mxu0 0.0
        %1355 = vmatpush1.msra.mxu0 0.0
        %1356 = vmatprep.subr.mxu0 0.0
        %1357 = vmatpush1.msra.mxu0 0.0
        %1358 = vmatprep.subr.mxu0 0.0
        %1359 = vmatpush1.msra.mxu0 0.0
        %1360 = vmatprep.subr.mxu0 0.0
        %1361 = vmatpush1.msra.mxu0 0.0
        %1362 = vmatprep.subr.mxu0 0.0
        %1363 = vmatpush1.msra.mxu0 0.0
        %1364 = vmatprep.subr.mxu0 0.0
        %1365 = vmatpush1.msra.mxu0 0.0
        %1366 = vmatprep.subr.mxu0 0.0
        %1367 = vmatpush1.msra.mxu0 0.0
        %1368 = vmatprep.subr.mxu0 0.0
        %1369 = vmatpush1.msra.mxu0 0.0
        %1370 = vmatprep.subr.mxu0 0.0
        %1371 = vmatpush1.msra.mxu0 0.0
        %1372 = vmatprep.subr.mxu0 0.0
        %1373 = vmatpush1.msra.mxu0 0.0
        %1374 = vmatprep.subr.mxu0 0.0
        %1375 = vmatpush1.msra.mxu0 0.0
        %1376 = vmatprep.subr.mxu0 0.0
        %1377 = vmatpush1.msra.mxu0 0.0
        %1378 = vmatprep.subr.mxu0 0.0
        %1379 = vmatpush1.msra.mxu0 0.0
        %1380 = vmatprep.subr.mxu0 0.0
        %1381 = vmatpush1.msra.mxu0 0.0
        %1382 = vmatprep.subr.mxu0 0.0
        %1383 = vmatpush1.msra.mxu0 0.0
        %1384 = vmatprep.subr.mxu0 0.0
        %1385 = vmatpush1.msra.mxu0 %v484
        %1386 = vmatprep.subr.mxu0 0.0
        %1387 = vmatpush2.msra.mxu0 0.0
        %1388 = vmatprep.subr.mxu0 0.0
        %1389 = vmatpush2.msra.mxu0 0.0
        %1390 = vmatprep.subr.mxu0 0.0
        %1391 = vmatpush2.msra.mxu0 0.0
        %1392 = vmatprep.subr.mxu0 0.0
        %1393 = vmatpush2.msra.mxu0 0.0
        %1394 = vmatprep.subr.mxu0 0.0
        %1395 = vmatpush2.msra.mxu0 0.0
        %1396 = vmatprep.subr.mxu0 0.0
        %1397 = vmatpush2.msra.mxu0 0.0
        %1398 = vmatprep.subr.mxu0 0.0
        %1399 = vmatpush2.msra.mxu0 0.0
        %1400 = vmatprep.subr.mxu0 0.0
        %1401 = vmatpush2.msra.mxu0 0.0
        %1402 = vmatprep.subr.mxu0 0.0
        %1403 = vmatpush2.msra.mxu0 0.0
        %1404 = vmatprep.subr.mxu0 0.0
        %1405 = vmatpush2.msra.mxu0 0.0
        %1406 = vmatprep.subr.mxu0 0.0
        %1407 = vmatpush2.msra.mxu0 0.0
        %1408 = vmatprep.subr.mxu0 0.0
        %1409 = vmatpush2.msra.mxu0 0.0
        %1410 = vmatprep.subr.mxu0 0.0
        %1411 = vmatpush2.msra.mxu0 0.0
        %1412 = vmatprep.subr.mxu0 0.0
        %1413 = vmatpush2.msra.mxu0 0.0
        %1414 = vmatprep.subr.mxu0 0.0
        %1415 = vmatpush2.msra.mxu0 0.0
        %1416 = vmatprep.subr.mxu0 0.0
        %1417 = vmatpush2.msra.mxu0 0.0
        %1418 = vmatprep.mubr.f32.mxu0 0.0
        %1419 = vmatmul.mubr.f32.gmra.mxu0 %v680
        %v1420 = vpop.f32.mrf.mxu0
        %v1421 = vadd.f32 %v1353, %v1420
        %v1422 = vpop.f32.mrf.mxu0
        %1423 = vmatprep.mubr.f32.mxu0 0.0
        %1424 = vmatmul.mubr.f32.gmra.mxu0 %v683
        %v1425 = vpop.f32.mrf.mxu0
        %v1426 = vadd.f32 %v1353, %v1425
        %v1427 = vpop.f32.mrf.mxu0
        %1428 = vdwg.mxu0
        %v1429 = vmax.f32 %v1421, 0.0
        %v1430 = vmax.f32 %v1426, 0.0
        %v1432 = vsel %vm513, %v1429, 0
        %v1435 = vsel %vm513, %v1430, 0
        %v1438 = vsel %vm513, %v1349, 0
        %1440 = vmatprep.subr.mxu0 0.0
        %1441 = vmatpush1.xpose.msra.mxu0 0.0
        %1442 = vmatprep.subr.mxu0 0.0
        %1443 = vmatpush1.xpose.msra.mxu0 0.0
        %1444 = vmatprep.subr.mxu0 0.0
        %1445 = vmatpush1.xpose.msra.mxu0 0.0
        %1446 = vmatprep.subr.mxu0 0.0
        %1447 = vmatpush1.xpose.msra.mxu0 0.0
        %1448 = vmatprep.subr.mxu0 0.0
        %1449 = vmatpush1.xpose.msra.mxu0 0.0
        %1450 = vmatprep.subr.mxu0 0.0
        %1451 = vmatpush1.xpose.msra.mxu0 0.0
        %1452 = vmatprep.subr.mxu0 0.0
        %1453 = vmatpush1.xpose.msra.mxu0 0.0
        %1454 = vmatprep.subr.mxu0 0.0
        %1455 = vmatpush1.xpose.msra.mxu0 0.0
        %1456 = vmatprep.subr.mxu0 0.0
        %1457 = vmatpush1.xpose.msra.mxu0 0.0
        %1458 = vmatprep.subr.mxu0 0.0
        %1459 = vmatpush1.xpose.msra.mxu0 0.0
        %1460 = vmatprep.subr.mxu0 0.0
        %1461 = vmatpush1.xpose.msra.mxu0 0.0
        %1462 = vmatprep.subr.mxu0 0.0
        %1463 = vmatpush1.xpose.msra.mxu0 0.0
        %1464 = vmatprep.subr.mxu0 0.0
        %1465 = vmatpush1.xpose.msra.mxu0 0.0
        %1466 = vmatprep.subr.mxu0 0.0
        %1467 = vmatpush1.xpose.msra.mxu0 0.0
        %1468 = vmatprep.subr.mxu0 0.0
        %1469 = vmatpush1.xpose.msra.mxu0 0.0
        %1470 = vmatprep.subr.mxu0 0.0
        %1471 = vmatpush1.xpose.msra.mxu0 %v1438
        %1472 = vmatprep.subr.mxu0 0.0
        %1473 = vmatpush2.xpose.msra.mxu0 0.0
        %1474 = vmatprep.subr.mxu0 0.0
        %1475 = vmatpush2.xpose.msra.mxu0 0.0
        %1476 = vmatprep.subr.mxu0 0.0
        %1477 = vmatpush2.xpose.msra.mxu0 0.0
        %1478 = vmatprep.subr.mxu0 0.0
        %1479 = vmatpush2.xpose.msra.mxu0 0.0
        %1480 = vmatprep.subr.mxu0 0.0
        %1481 = vmatpush2.xpose.msra.mxu0 0.0
        %1482 = vmatprep.subr.mxu0 0.0
        %1483 = vmatpush2.xpose.msra.mxu0 0.0
        %1484 = vmatprep.subr.mxu0 0.0
        %1485 = vmatpush2.xpose.msra.mxu0 0.0
        %1486 = vmatprep.subr.mxu0 0.0
        %1487 = vmatpush2.xpose.msra.mxu0 0.0
        %1488 = vmatprep.subr.mxu0 0.0
        %1489 = vmatpush2.xpose.msra.mxu0 0.0
        %1490 = vmatprep.subr.mxu0 0.0
        %1491 = vmatpush2.xpose.msra.mxu0 0.0
        %1492 = vmatprep.subr.mxu0 0.0
        %1493 = vmatpush2.xpose.msra.mxu0 0.0
        %1494 = vmatprep.subr.mxu0 0.0
        %1495 = vmatpush2.xpose.msra.mxu0 0.0
        %1496 = vmatprep.subr.mxu0 0.0
        %1497 = vmatpush2.xpose.msra.mxu0 0.0
        %1498 = vmatprep.subr.mxu0 0.0
        %1499 = vmatpush2.xpose.msra.mxu0 0.0
        %1500 = vmatprep.subr.mxu0 0.0
        %1501 = vmatpush2.xpose.msra.mxu0 0.0
        %1502 = vmatprep.subr.mxu0 0.0
        %1503 = vmatpush2.xpose.msra.mxu0 0.0
        %1504 = vmatprep.mubr.f32.mxu0 0.0
        %1505 = vmatmul.mubr.f32.gmra.mxu0 %v1432
        %v1506 = vpop.f32.mrf.mxu0
        %v1507 = vadd.f32 0.0, %v1506
        %v1508 = vpop.f32.mrf.mxu0
        %1509 = vmatprep.mubr.f32.mxu0 0.0
        %1510 = vmatmul.mubr.f32.gmra.mxu0 %v1435
        %v1511 = vpop.f32.mrf.mxu0
        %v1512 = vadd.f32 0.0, %v1511
        %v1513 = vpop.f32.mrf.mxu0
        %1514 = vdwg.mxu0
        %v1515 = vstv %s506
        %v1516 = vmul.f32 %v1515, %v1507
        %v1517 = vmul.f32 %v1515, %v1512
        %v1518 = vadd.f32 %v1516, %v595
        %v1519 = vadd.f32 %v1517, %v596
        %1520 = vst.msk [vmem:[%s478] sm:$0xff] %vm513, %v1518
        %1521 = vst.msk [vmem:[%s478 + $0x8] sm:$0xff] %vm513, %v1519
        %p1522 = scmp.lt.s32.totalorder %s31, 1
        %s1523 = scalar_select %p1522, %s31, 1
        %s1524 = smul.addr %s1523, 2
        %s1525 = smul.addr %s1524, 8
        %s1526 = scalar_lea.vmem %s11, %s1525
        %s1527 = sand.u32 %s306, 1
        %s1528 = scalar_lea.sflag [#allocation4], %s1527
        %s1529 = sand.u32 %s306, 1
        %s1530 = smul.addr %s1529, 32
        %s1531 = scalar_lea.vmem [#allocation7], %s1530
        // Predicated region
        $region73: #{window_attention_forward.1} parent=63 // pred_check
          %p1532 = pneg %p290
        $region74: #{window_attention_forward.1} parent=63 // pred_check_branch
          %1534 = sbr.rel (%p1532) target = $region76
        $region75: #{window_attention_forward.1} parent=63 // pred_region
          _
        $region76: #{window_attention_forward.1} parent=63 // pred_fallthru
          _
        // Predicated region
        $region77: #{window_attention_forward.1} parent=63 // pred_check
          %p1535 = pneg %p316
        $region78: #{window_attention_forward.1} parent=63 // pred_check_branch
          %1537 = sbr.rel (%p1535) target = $region80
        $region79: #{window_attention_forward.1} parent=63 // pred_region
          %s1539 = ssub.s32 512, 512
          %1540 = vsyncadd %s1528, %s1539
          %s1541 = smul.addr %s31, 4
          %s1542 = smul.addr %s1541, 128
          %s1543 = scalar_lea.hbm %s12, %s1542
          %s1544 = sshll.u32 %s1531, 4
          %s1545 = int_to_ptr.vmem [resolvable:$true] %s1544
          %1550 = dma.vmem_to_hbm [thread:$0]  %s1545, 512, %s1543, %s1528, 128, 128, 8
        $region80: #{window_attention_forward.1} parent=63 // pred_fallthru
          _
      $region64: #{window_attention_forward.1} parent=5 // pred_fallthru
        _
      %p1551 = scmp.le.s32.totalorder 2, %s26
      // Predicated region
      $region81: #{window_attention_forward.1} parent=5 // pred_check
        %p1552 = pneg %p1551
      $region82: #{window_attention_forward.1} parent=5 // pred_check_branch
        %1554 = sbr.rel (%p1552) target = $region84
      $region83: #{window_attention_forward.1} parent=5 // pred_region
        %s1555 = ssub.s32 %s26, 2
        // Predicated region
        $region85: #{window_attention_forward.1} parent=83 // pred_check
          %p1556 = pneg %p296
        $region86: #{window_attention_forward.1} parent=83 // pred_check_branch
          %1558 = sbr.rel (%p1556) target = $region88
        $region87: #{window_attention_forward.1} parent=83 // pred_region
          %p1559 = scmp.lt.s32.totalorder %s32, 1
          %s1560 = scalar_select %p1559, %s32, 1
          %s1561 = smul.addr %s1560, 2
          %s1562 = smul.addr %s1561, 8
          %s1563 = scalar_lea.vmem %s11, %s1562
        $region88: #{window_attention_forward.1} parent=83 // pred_fallthru
          _
        // Predicated region
        $region89: #{window_attention_forward.1} parent=83 // pred_check
          %p1564 = pneg %p322
        $region90: #{window_attention_forward.1} parent=83 // pred_check_branch
          %1566 = sbr.rel (%p1564) target = $region92
        $region91: #{window_attention_forward.1} parent=83 // pred_region
          %s1567 = sand.u32 %s307, 1
          %s1568 = scalar_lea.sflag [#allocation4], %s1567
          %s1569 = sand.u32 %s307, 1
          %s1570 = smul.addr %s1569, 32
          %s1571 = scalar_lea.vmem [#allocation7], %s1570
          %1572 = dma.done %s1568, 512
        $region92: #{window_attention_forward.1} parent=83 // pred_fallthru
          _
      $region84: #{window_attention_forward.1} parent=5 // pred_fallthru
        _
    $region6: #{window_attention_forward.1} parent=1 // loop_footer
      %s30 = sadd.s32 1, %s26
    $region7: #{window_attention_forward.1} parent=1 // loop_footer_branch
      %25 = sbr.rel target = $region3
    $region8: #{window_attention_forward.1} parent=1 // loop_exit
      _
    %1573 = vsyncpa [#allocation3], 1
    %s1574 = scalar_lea.sflag [#allocation3], 1
    %1575 = vsyncpa %s1574, 1
    %1576 = vsyncpa [#allocation4], 1
    %s1577 = scalar_lea.sflag [#allocation4], 1
    %1578 = vsyncpa %s1577, 1
    %1579 = vsyncpa [#allocation5], 1
    %s1580 = scalar_lea.sflag [#allocation5], 1
    %1581 = vsyncpa %s1580, 1

</llo_original>
